<compile_context>
chip_gen: v6e
topology: v6e:2x2x1
jax: 0.10.0
libtpu: 0.0.40
codegen_flags: <defaults>
</compile_context>

<pallas_src>
import functools

import jax
import jax.numpy as jnp
import numpy as np
from jax import lax
from jax.experimental import pallas as pl
from jax.experimental.pallas import tpu as pltpu


def _round_up(x: int, m: int) -> int:
    return ((x + m - 1) // m) * m


# ----------------------------- Pallas kernel --------------------------------
def _fused_conv_lrelu_kernel(x_ref, w_ref, b_ref, o_ref, *, tm, ws, negative_slope):
    """One (TM, COUT_PAD) output row-tile of the s2d-decomposed 4x4/s2 conv.

    x_ref: (1, R_pad, K_pad)      bf16  per-image space-to-depth matrix (resident)
    w_ref: (4*K_pad, COUT_PAD)    bf16  2x2-tap weights stacked along the contracting dim
    b_ref: (1, COUT_PAD)          f32
    o_ref: (1, TM, COUT_PAD)      out dtype
    """
    t = pl.program_id(1)
    m0 = pl.multiple_of(t * tm, 16)        # tm is a multiple of 16
    mw = pl.multiple_of(t * tm + ws, 16)   # ws is a multiple of 16

    # Two sublane-aligned slab loads; the +1 (w+1) taps are static row shifts of
    # already-loaded values (XLU relayout) instead of unaligned VMEM loads.
    s0 = x_ref[0, pl.ds(m0, tm + 16), :]
    s1 = x_ref[0, pl.ds(mw, tm + 16), :]

    # Fused im2col: stack the 4 shifted windows along the contracting dim and run a
    # single MXU matmul (f32 accumulation stays inside the MXU result path).
    lhs = jnp.concatenate([s0[:tm], s0[1:tm + 1], s1[:tm], s1[1:tm + 1]], axis=1)
    acc = jnp.dot(lhs, w_ref[...], preferred_element_type=jnp.float32)

    acc = acc + b_ref[...]                                  # bias (f32)
    acc = jnp.where(acc >= 0, acc, negative_slope * acc)    # LeakyReLU(0.2), f32 epilogue
    o_ref[0] = acc.astype(o_ref.dtype)


# ------------------------------ forward (NHWC core) --------------------------
def downsample_block_forward_nhwc(x_nhwc, weight, bias, *, negative_slope=0.2,
                                  out_dtype=None):
    """Conv2d(k=4, s=2, p=1) + LeakyReLU(0.2) + Dropout(eval=identity); NHWC in/out."""
    N, H, W, Cin = x_nhwc.shape
    Cout = weight.shape[0]
    assert weight.shape == (Cout, Cin, 4, 4)
    out_dtype = x_nhwc.dtype if out_dtype is None else out_dtype
    out_bytes = jnp.dtype(out_dtype).itemsize

    Ho = (H + 2 - 4) // 2 + 1
    Wo = (W + 2 - 4) // 2 + 1

    # ---- geometry: space-to-depth turns the 4x4/s2 conv into a 2x2/s1 conv -----
    Ws = _round_up((W + 3) // 2, 16)        # ceil((W+2)/2), rounded so Ws % 16 == 0
    Wp = 2 * Ws
    Cin_pad = _round_up(Cin, 32)            # => K_pad = 4*Cin_pad is a multiple of 128
    K_pad = 4 * Cin_pad
    Cout_pad = _round_up(Cout, 128)         # lane-dense output block

    M = Ho * Ws                             # flattened output rows (incl. garbage cols)
    TM = min(256, _round_up(M, 16))
    num_tiles = -(-M // TM)
    if N % 2 == 1 and num_tiles % 2 == 1 and num_tiles > 1:
        num_tiles += 1                      # megacore balance (v7x) when N is odd
    M_pad = num_tiles * TM

    # Rows needed by the last tile's slab loads: M_pad + Ws + 16.
    Hs = max(-(-(M_pad + Ws + 16) // Ws), (H + 3) // 2)
    Hp = 2 * Hs
    R_pad = Hs * Ws

    # ---- bf16 cast first, then ONE pad + space-to-depth reshape/transpose ------
    xb = x_nhwc.astype(jnp.bfloat16)
    xp = jnp.pad(xb, ((0, 0), (1, Hp - 1 - H), (1, Wp - 1 - W), (0, Cin_pad - Cin)))
    xs = xp.reshape(N, Hs, 2, Ws, 2, Cin_pad)            # (n, hs, di, ws, dj, c)
    x2d = xs.transpose(0, 1, 3, 2, 4, 5).reshape(N, R_pad, K_pad)

    # ---- weights: (Cout, Cin, 4, 4) -> (4*K_pad, Cout_pad), bf16 ----------------
    # tap s = i*2+j (kh = 2i+di, kw = 2j+dj); within-tap k = (di*2+dj)*Cin_pad + c
    wpad = jnp.pad(weight, ((0, 0), (0, Cin_pad - Cin), (0, 0), (0, 0)))
    w6 = wpad.reshape(Cout, Cin_pad, 2, 2, 2, 2)          # (o, c, i, di, j, dj)
    w2 = w6.transpose(2, 4, 3, 5, 1, 0).reshape(4 * K_pad, Cout)
    w2 = jnp.pad(w2, ((0, 0), (0, Cout_pad - Cout))).astype(jnp.bfloat16)

    b2 = jnp.pad(bias.astype(jnp.float32), (0, Cout_pad - Cout)).reshape(1, Cout_pad)

    # ---- pallas_call ------------------------------------------------------------
    kernel = functools.partial(_fused_conv_lrelu_kernel, tm=TM, ws=Ws,
                               negative_slope=negative_slope)

    flops = 2 * N * M_pad * (4 * K_pad) * Cout_pad
    bytes_accessed = (x2d.size * 2 + w2.size * 2 + b2.size * 4
                      + N * M_pad * Cout_pad * out_bytes)

    try:
        vmem_cap = int(pltpu.get_tpu_info().vmem_capacity_bytes)
    except Exception:
        vmem_cap = 64 << 20                 # conservative (v7x-class per-TC VMEM)
    vmem_cap = min(max(vmem_cap - (8 << 20), 32 << 20), 100 << 20)

    def run(image_bufs: int):
        single = image_bufs == 1
        # Actual footprint: resident image, constant weights/bias, double-buffered
        # output tile, plus in-kernel temporaries (slabs, stacked lhs, f32 acc).
        fp = (image_bufs * R_pad * K_pad * 2
              + image_bufs * (4 * K_pad * Cout_pad * 2 + Cout_pad * 4)
              + 2 * TM * Cout_pad * out_bytes
              + 2 * (TM + 16) * K_pad * 2 + TM * 4 * K_pad * 2
              + TM * Cout_pad * 4)
        vmem_limit = int(min(vmem_cap, max(int(fp * 1.25) + (2 << 20), 16 << 20)))

        def spec(shape, imap):
            if single:
                return pl.BlockSpec(shape, imap,
                                    pipeline_mode=pl.Buffered(buffer_count=1))
            return pl.BlockSpec(shape, imap)

        return pl.pallas_call(
            kernel,
            out_shape=jax.ShapeDtypeStruct((N, M_pad, Cout_pad), out_dtype),
            grid_spec=pltpu.PrefetchScalarGridSpec(
                num_scalar_prefetch=0,
                grid=(N, num_tiles),
                in_specs=[
                    spec((1, R_pad, K_pad), lambda n, t: (n, 0, 0)),     # resident image
                    spec((4 * K_pad, Cout_pad), lambda n, t: (0, 0)),    # weights (const)
                    spec((1, Cout_pad), lambda n, t: (0, 0)),            # bias (const)
                ],
                out_specs=pl.BlockSpec((1, TM, Cout_pad), lambda n, t: (n, t, 0)),
            ),
            compiler_params=pltpu.CompilerParams(
                dimension_semantics=("parallel", "parallel"),
                vmem_limit_bytes=vmem_limit,
            ),
            cost_estimate=pl.CostEstimate(flops=flops, transcendentals=0,
                                          bytes_accessed=bytes_accessed),
        )(x2d, w2, b2)

    try:
        out = run(image_bufs=1)             # single-buffer image + constants
    except Exception:
        # TODO(synk): pipeline_mode=pl.Buffered(1) unavailable on this jax build;
        # fall back to default double-buffering (costs VMEM only, not correctness).
        out = run(image_bufs=2)

    # Slice off K/Cout padding and garbage columns; XLA fuses these into one copy.
    out = lax.slice(out, (0, 0, 0), (N, Ho * Ws, Cout))
    out = out.reshape(N, Ho, Ws, Cout)
    out = lax.slice(out, (0, 0, 0, 0), (N, Ho, Wo, Cout))
    # Dropout (inference): identity.
    return out


# ------------------------------ forward (NCHW wrapper) -----------------------
def downsample_block_forward(x_nchw, weight, bias, *, negative_slope=0.2):
    """PyTorch-equivalent forward: (N, Cin, H, W) -> (N, Cout, H//2, W//2)."""
    # TODO(synk): keep the surrounding model in NHWC to drop these two transpose passes.
    x_nhwc = jnp.transpose(x_nchw, (0, 2, 3, 1))
    y = downsample_block_forward_nhwc(x_nhwc, weight, bias,
                                      negative_slope=negative_slope)
    return jnp.transpose(y, (0, 3, 1, 2))


# ------------------------------ main / check ---------------------------------
if __name__ == "__main__":
    key = jax.random.PRNGKey(0)
    k_x, k_w, k_b = jax.random.split(key, 3)

    N, Cin, H, W = 2, 4, 16, 16
    Cout = 8

    x = jax.random.normal(k_x, (N, Cin, H, W), dtype=jnp.float32)
    fan_in = Cin * 4 * 4
    bound = 1.0 / np.sqrt(fan_in)
    weight = jax.random.uniform(k_w, (Cout, Cin, 4, 4), jnp.float32, -bound, bound)
    bias = jax.random.uniform(k_b, (Cout,), jnp.float32, -bound, bound)

    y = downsample_block_forward(x, weight, bias)
    y = jax.block_until_ready(y)

    # Reference: XLA conv on the same bf16-cast operands (f32 accumulation),
    # + bias + LeakyReLU.  Dropout is identity in inference.
    ref = lax.conv_general_dilated(
        x.astype(jnp.bfloat16), weight.astype(jnp.bfloat16),
        window_strides=(2, 2), padding=((1, 1), (1, 1)),
        dimension_numbers=("NCHW", "OIHW", "NCHW"),
        preferred_element_type=jnp.float32)
    ref = ref + bias.reshape(1, Cout, 1, 1)
    ref = jnp.where(ref >= 0, ref, 0.2 * ref)

    assert y.shape == (N, Cout, H // 2, W // 2), y.shape
    np.testing.assert_allclose(np.asarray(y), np.asarray(ref), rtol=1e-4, atol=1e-4)
    print("KERNEL_OK")
</pallas_src>

<mosaic_0001>
module attributes {stable_mosaic.version = 11 : i64} {
  func.func @_fused_conv_lrelu_kernel(%arg0: i32, %arg1: i32, %arg2: memref<1x160x128xbf16, #tpu.memory_space<vmem>>, %arg3: memref<512x128xbf16, #tpu.memory_space<vmem>>, %arg4: memref<1x128xf32, #tpu.memory_space<vmem>>, %arg5: memref<1x128x128xf32, #tpu.memory_space<vmem>>) attributes {dimension_semantics = [#tpu.dimension_semantics<parallel>, #tpu.dimension_semantics<parallel>], iteration_bounds = array<i64: 2, 1>, scalar_prefetch = 0 : i64, scratch_operands = 0 : i64, tpu.core_type = #tpu.core_type<tc>, window_params = [{pipeline_mode = #tpu.pipeline_mode<synchronous>, transform_indices = @transform_0, window_bounds = array<i64: 1, 160, 128>}, {pipeline_mode = #tpu.pipeline_mode<synchronous>, transform_indices = @transform_1, window_bounds = array<i64: 512, 128>}, {pipeline_mode = #tpu.pipeline_mode<synchronous>, transform_indices = @transform_2, window_bounds = array<i64: 1, 128>}, {transform_indices = @transform_3, window_bounds = array<i64: 1, 128, 128>}]} {
    %c128_i32 = arith.constant 128 : i32
    %0 = arith.muli %arg1, %c128_i32 : i32
    %1 = tpu.assume_multiple %0, 16 : i32
    %c128_i32_0 = arith.constant 128 : i32
    %2 = arith.muli %arg1, %c128_i32_0 : i32
    %c16_i32 = arith.constant 16 : i32
    %3 = arith.addi %2, %c16_i32 : i32
    %4 = tpu.assume_multiple %3, 16 : i32
    %c0 = arith.constant 0 : index
    %5 = arith.index_cast %1 : i32 to index
    %c0_1 = arith.constant 0 : index
    %6 = vector.load %arg2[%c0, %5, %c0_1] : memref<1x160x128xbf16, #tpu.memory_space<vmem>>, vector<1x144x128xbf16>
    %7 = vector.shape_cast %6 : vector<1x144x128xbf16> to vector<144x128xbf16>
    %c0_2 = arith.constant 0 : index
    %8 = arith.index_cast %4 : i32 to index
    %c0_3 = arith.constant 0 : index
    %9 = vector.load %arg2[%c0_2, %8, %c0_3] : memref<1x160x128xbf16, #tpu.memory_space<vmem>>, vector<1x144x128xbf16>
    %10 = vector.shape_cast %9 : vector<1x144x128xbf16> to vector<144x128xbf16>
    %11 = vector.extract_strided_slice %7 {offsets = [0, 0], sizes = [128, 128], strides = [1, 1]} : vector<144x128xbf16> to vector<128x128xbf16>
    %12 = vector.extract_strided_slice %7 {offsets = [1, 0], sizes = [128, 128], strides = [1, 1]} : vector<144x128xbf16> to vector<128x128xbf16>
    %13 = vector.extract_strided_slice %10 {offsets = [0, 0], sizes = [128, 128], strides = [1, 1]} : vector<144x128xbf16> to vector<128x128xbf16>
    %14 = vector.extract_strided_slice %10 {offsets = [1, 0], sizes = [128, 128], strides = [1, 1]} : vector<144x128xbf16> to vector<128x128xbf16>
    %15 = tpu.concatenate %11, %12, %13, %14 in 1 : vector<128x128xbf16>, vector<128x128xbf16>, vector<128x128xbf16>, vector<128x128xbf16> -> vector<128x512xbf16>
    %c0_4 = arith.constant 0 : index
    %c0_5 = arith.constant 0 : index
    %16 = vector.load %arg3[%c0_4, %c0_5] : memref<512x128xbf16, #tpu.memory_space<vmem>>, vector<512x128xbf16>
    %cst = arith.constant dense<0.000000e+00> : vector<128x128xf32>
    %17 = tpu.matmul %15, %16, %cst {dimension_numbers = #tpu.dot_dimension_numbers<[1], [0], [0], [1], [0, 0, 1, 1], [], []>} : vector<128x512xbf16>, vector<512x128xbf16>, vector<128x128xf32> -> vector<128x128xf32>
    %c0_6 = arith.constant 0 : index
    %c0_7 = arith.constant 0 : index
    %18 = vector.load %arg4[%c0_6, %c0_7] : memref<1x128xf32, #tpu.memory_space<vmem>>, vector<1x128xf32>
    %19 = vector.broadcast %18 : vector<1x128xf32> to vector<128x128xf32>
    %20 = arith.addf %17, %19 : vector<128x128xf32>
    %cst_8 = arith.constant 0.000000e+00 : f32
    %21 = vector.broadcast %cst_8 : f32 to vector<128x128xf32>
    %22 = arith.cmpf oge, %20, %21 : vector<128x128xf32>
    %cst_9 = arith.constant 2.000000e-01 : f32
    %23 = vector.broadcast %cst_9 : f32 to vector<128x128xf32>
    %24 = arith.mulf %23, %20 : vector<128x128xf32>
    %25 = arith.select %22, %20, %24 : vector<128x128xi1>, vector<128x128xf32>
    %c0_10 = arith.constant 0 : index
    %c0_11 = arith.constant 0 : index
    %c0_12 = arith.constant 0 : index
    %26 = vector.load %arg5[%c0_10, %c0_11, %c0_12] : memref<1x128x128xf32, #tpu.memory_space<vmem>>, vector<1x128x128xf32>
    %27 = vector.shape_cast %26 : vector<1x128x128xf32> to vector<128x128xf32>
    %28 = vector.shape_cast %25 : vector<128x128xf32> to vector<1x128x128xf32>
    tpu.vector_store %arg5[%c0_10, %c0_11, %c0_12], %28 {strides = array<i32>} : memref<1x128x128xf32, #tpu.memory_space<vmem>>, vector<1x128x128xf32>,
    return
  }
  func.func @transform_0(%arg0: i32, %arg1: i32) -> (i32, i32, i32) {
    %c0_i32 = arith.constant 0 : i32
    %c0_i32_0 = arith.constant 0 : i32
    %c0_i32_1 = arith.constant 0 : i32
    return %arg0, %c0_i32, %c0_i32_0 : i32, i32, i32
  }
  func.func @transform_1(%arg0: i32, %arg1: i32) -> (i32, i32) {
    %c0_i32 = arith.constant 0 : i32
    %c0_i32_0 = arith.constant 0 : i32
    %c0_i32_1 = arith.constant 0 : i32
    return %c0_i32, %c0_i32_0 : i32, i32
  }
  func.func @transform_2(%arg0: i32, %arg1: i32) -> (i32, i32) {
    %c0_i32 = arith.constant 0 : i32
    %c0_i32_0 = arith.constant 0 : i32
    %c0_i32_1 = arith.constant 0 : i32
    return %c0_i32, %c0_i32_0 : i32, i32
  }
  func.func @transform_3(%arg0: i32, %arg1: i32) -> (i32, i32, i32) {
    %c0_i32 = arith.constant 0 : i32
    %c0_i32_0 = arith.constant 0 : i32
    return %arg0, %arg1, %c0_i32 : i32, i32, i32
  }
}

module attributes {stable_mosaic.version = 11 : i64} {
  func.func @_fused_conv_lrelu_kernel(%arg0: i32, %arg1: i32, %arg2: memref<1x160x128xbf16, #tpu.memory_space<vmem>>, %arg3: memref<512x128xbf16, #tpu.memory_space<vmem>>, %arg4: memref<1x128xf32, #tpu.memory_space<vmem>>, %arg5: memref<1x128x128xf32, #tpu.memory_space<vmem>>) attributes {dimension_semantics = [#tpu.dimension_semantics<parallel>, #tpu.dimension_semantics<parallel>], iteration_bounds = array<i64: 2, 1>, scalar_prefetch = 0 : i64, scratch_operands = 0 : i64, tpu.core_type = #tpu.core_type<tc>, window_params = [{transform_indices = @transform_0, window_bounds = array<i64: 1, 160, 128>}, {pipeline_mode = #tpu.pipeline_mode<synchronous>, transform_indices = @transform_1, window_bounds = array<i64: 512, 128>}, {pipeline_mode = #tpu.pipeline_mode<synchronous>, transform_indices = @transform_2, window_bounds = array<i64: 1, 128>}, {transform_indices = @transform_3, window_bounds = array<i64: 1, 128, 128>}]} {
    %c128_i32 = arith.constant 128 : i32
    %0 = arith.muli %arg1, %c128_i32 : i32
    %1 = tpu.assume_multiple %0, 16 : i32
    %c128_i32_0 = arith.constant 128 : i32
    %2 = arith.muli %arg1, %c128_i32_0 : i32
    %c16_i32 = arith.constant 16 : i32
    %3 = arith.addi %2, %c16_i32 : i32
    %4 = tpu.assume_multiple %3, 16 : i32
    %c0 = arith.constant 0 : index
    %5 = arith.index_cast %1 : i32 to index
    %c0_1 = arith.constant 0 : index
    %6 = vector.load %arg2[%c0, %5, %c0_1] : memref<1x160x128xbf16, #tpu.memory_space<vmem>>, vector<1x144x128xbf16>
    %7 = vector.shape_cast %6 : vector<1x144x128xbf16> to vector<144x128xbf16>
    %c0_2 = arith.constant 0 : index
    %8 = arith.index_cast %4 : i32 to index
    %c0_3 = arith.constant 0 : index
    %9 = vector.load %arg2[%c0_2, %8, %c0_3] : memref<1x160x128xbf16, #tpu.memory_space<vmem>>, vector<1x144x128xbf16>
    %10 = vector.shape_cast %9 : vector<1x144x128xbf16> to vector<144x128xbf16>
    %11 = vector.extract_strided_slice %7 {offsets = [0, 0], sizes = [128, 128], strides = [1, 1]} : vector<144x128xbf16> to vector<128x128xbf16>
    %12 = vector.extract_strided_slice %7 {offsets = [1, 0], sizes = [128, 128], strides = [1, 1]} : vector<144x128xbf16> to vector<128x128xbf16>
    %13 = vector.extract_strided_slice %10 {offsets = [0, 0], sizes = [128, 128], strides = [1, 1]} : vector<144x128xbf16> to vector<128x128xbf16>
    %14 = vector.extract_strided_slice %10 {offsets = [1, 0], sizes = [128, 128], strides = [1, 1]} : vector<144x128xbf16> to vector<128x128xbf16>
    %15 = tpu.concatenate %11, %12, %13, %14 in 1 : vector<128x128xbf16>, vector<128x128xbf16>, vector<128x128xbf16>, vector<128x128xbf16> -> vector<128x512xbf16>
    %c0_4 = arith.constant 0 : index
    %c0_5 = arith.constant 0 : index
    %16 = vector.load %arg3[%c0_4, %c0_5] : memref<512x128xbf16, #tpu.memory_space<vmem>>, vector<512x128xbf16>
    %cst = arith.constant dense<0.000000e+00> : vector<128x128xf32>
    %17 = tpu.matmul %15, %16, %cst {dimension_numbers = #tpu.dot_dimension_numbers<[1], [0], [0], [1], [0, 0, 1, 1], [], []>} : vector<128x512xbf16>, vector<512x128xbf16>, vector<128x128xf32> -> vector<128x128xf32>
    %c0_6 = arith.constant 0 : index
    %c0_7 = arith.constant 0 : index
    %18 = vector.load %arg4[%c0_6, %c0_7] : memref<1x128xf32, #tpu.memory_space<vmem>>, vector<1x128xf32>
    %19 = vector.broadcast %18 : vector<1x128xf32> to vector<128x128xf32>
    %20 = arith.addf %17, %19 : vector<128x128xf32>
    %cst_8 = arith.constant 0.000000e+00 : f32
    %21 = vector.broadcast %cst_8 : f32 to vector<128x128xf32>
    %22 = arith.cmpf oge, %20, %21 : vector<128x128xf32>
    %cst_9 = arith.constant 2.000000e-01 : f32
    %23 = vector.broadcast %cst_9 : f32 to vector<128x128xf32>
    %24 = arith.mulf %23, %20 : vector<128x128xf32>
    %25 = arith.select %22, %20, %24 : vector<128x128xi1>, vector<128x128xf32>
    %c0_10 = arith.constant 0 : index
    %c0_11 = arith.constant 0 : index
    %c0_12 = arith.constant 0 : index
    %26 = vector.load %arg5[%c0_10, %c0_11, %c0_12] : memref<1x128x128xf32, #tpu.memory_space<vmem>>, vector<1x128x128xf32>
    %27 = vector.shape_cast %26 : vector<1x128x128xf32> to vector<128x128xf32>
    %28 = vector.shape_cast %25 : vector<128x128xf32> to vector<1x128x128xf32>
    tpu.vector_store %arg5[%c0_10, %c0_11, %c0_12], %28 {strides = array<i32>} : memref<1x128x128xf32, #tpu.memory_space<vmem>>, vector<1x128x128xf32>,
    return
  }
  func.func @transform_0(%arg0: i32, %arg1: i32) -> (i32, i32, i32) {
    %c0_i32 = arith.constant 0 : i32
    %c0_i32_0 = arith.constant 0 : i32
    %c0_i32_1 = arith.constant 0 : i32
    return %arg0, %c0_i32, %c0_i32_0 : i32, i32, i32
  }
  func.func @transform_1(%arg0: i32, %arg1: i32) -> (i32, i32) {
    %c0_i32 = arith.constant 0 : i32
    %c0_i32_0 = arith.constant 0 : i32
    %c0_i32_1 = arith.constant 0 : i32
    return %c0_i32, %c0_i32_0 : i32, i32
  }
  func.func @transform_2(%arg0: i32, %arg1: i32) -> (i32, i32) {
    %c0_i32 = arith.constant 0 : i32
    %c0_i32_0 = arith.constant 0 : i32
    %c0_i32_1 = arith.constant 0 : i32
    return %c0_i32, %c0_i32_0 : i32, i32
  }
  func.func @transform_3(%arg0: i32, %arg1: i32) -> (i32, i32, i32) {
    %c0_i32 = arith.constant 0 : i32
    %c0_i32_0 = arith.constant 0 : i32
    return %arg0, %arg1, %c0_i32 : i32, i32, i32
  }
}

</mosaic_0001>

<llo_original>
// kernel: tpu_custom_call.1
$region0: #{tpu_custom_call.1}
  #allocation0 [shape = 'u32[]', space=smem, size = 0x4, offset = 0x4, fixed_abs, tag = 'smem constant byte address 0x4 - core index']
  #allocation1 [shape = 'u32[144,128]{1,0:T(1,128)}', space=vmem, size = 0x12000, scoped, tag = 'internal scratch']
  %s0 = inlined_call_operand.hbm [shape: bf16[2,160,128], index: 0, kind: input, shape index: {}]
  %s1 = inlined_call_operand.hbm [shape: bf16[512,128], index: 1, kind: input, shape index: {}]
  %s2 = inlined_call_operand.vmem [shape: f32[1,128], index: 2, kind: input, shape index: {}]
  %s3 = inlined_call_operand.hbm [shape: f32[2,128,128], index: 3, kind: output, shape index: {}]
  %s4 = sld [smem:[#allocation0]]
  $region53: #{tpu_custom_call.1} parent=0
    _
  %s6 = ssub.s32 1, %s4
  %s7 = scalar_select 0, %s6, %s4
  $region1: #{tpu_custom_call.1} parent=0
    #allocation2 [shape = 'u8[40960]{0}', space=vmem, size = 0xa000, scoped, tag = 'input window, operand 0, single buffered']
    #allocation3 [shape = 's32[2]{0}', space=sflag, size = 0x8, scoped, tag = 'scoped memory for tpu_custom_call.1']
    #allocation4 [shape = 's32[2]{0}', space=sflag, size = 0x8, scoped, tag = 'scoped memory for tpu_custom_call.1']
    #allocation5 [shape = 'u8[131072]{0}', space=vmem, size = 0x20000, scoped, tag = 'input window, operand 1, single buffered']
    #allocation6 [shape = 's32[1]{0}', space=sflag, size = 0x4, scoped, tag = 'scoped memory for tpu_custom_call.1']
    #allocation7 [shape = 'u8[131072]{0}', space=vmem, size = 0x20000, scoped, tag = 'output window, operand 0']
    %8 = vsyncpa [#allocation3], 0
    %9 = vsyncpa [#allocation6], 0
    %10 = vsyncpa [#allocation4], 0
    %s11 = scalar_lea.sflag [#allocation4], 1
    %12 = vsyncpa %s11, 0
    loop: start=0, step=1, limit=4
    $region2: #{tpu_custom_call.1} parent=1 // loop_pre_header
      _
    $region3: #{tpu_custom_call.1} parent=1 // loop_header
      %s14 = sphi 0, %s18
      %p15 = scmp.ge.s32.totalorder %s14, 4
      %s21 = sphi 0, %s33
      %s22 = sphi 0, %s29
      %s23 = sphi 0, %s21
      %s24 = sphi 0, %s22
      %s25 = sphi 0, %s23
      %s26 = sphi 0, %s24
      %s36 = sphi 0, %s38
      %s39 = sphi 0, %s36
      %s40 = sphi 0, %s39
      %s56 = sphi 0, %s40
      %s60 = sphi 0, %s60
      %s62 = sphi 0, %s60
      %s63 = sphi 0, %s62
      %s77 = sphi 0, %s63
      %s81 = sphi 0, %s81
      %s83 = sphi 0, %s81
      %s84 = sphi 0, %s83
      %s98 = sphi 0, %s84
      %s106 = sphi 0, %s108
      %s109 = sphi 0, %s106
      %s110 = sphi 0, %s109
      %s126 = sphi 0, %s110
    $region4: #{tpu_custom_call.1} parent=1 // loop_header_branch
      %17 = sbr.rel (%p15) target = $region8
    $region5: #{tpu_custom_call.1} parent=1 // loop_body
      %s19 = ssub.s32 %s14, 1
      %s20 = ssub.s32 %s14, 2
      %s27 = sadd.s32 1, %s22
      %p28 = scmp.ge.s32.totalorder %s27, 1
      %s29 = scalar_select %p28, 0, %s27
      %s30 = sadd.s32 1, %s21
      %s31 = scalar_select %p28, %s30, %s21
      %p32 = scmp.ge.s32.totalorder %s31, 2
      %s33 = scalar_select %p32, 0, %s31
      %s34 = ssub.s32 %s21, %s33
      %p35 = scmp.eq.s32.totalorder %s34, 0
      %s37 = sadd.s32 %s36, 1
      %s38 = scalar_select %p35, %s36, %s37
      %p41 = pneg %p35
      %p42 = scmp.eq.s32.totalorder %s14, 1
      %p43 = por %p41, %p42
      %p44 = scmp.ne.s32.totalorder %s36, %s39
      %p45 = scmp.eq.s32.totalorder %s14, 0
      %p46 = por %p44, %p45
      %p47 = scmp.ne.s32.totalorder %s36, %s39
      %p48 = scmp.eq.s32.totalorder %s19, 1
      %p49 = por %p47, %p48
      %p50 = scmp.ne.s32.totalorder %s39, %s40
      %p51 = scmp.eq.s32.totalorder %s19, 0
      %p52 = por %p50, %p51
      %p53 = scmp.ne.s32.totalorder %s39, %s40
      %p54 = scmp.eq.s32.totalorder %s20, 1
      %p55 = por %p53, %p54
      %p57 = scmp.ne.s32.totalorder %s40, %s56
      %p58 = scmp.eq.s32.totalorder %s20, 0
      %p59 = por %p57, %p58
      %s61 = sadd.s32 %s60, 1
      %p64 = scmp.eq.s32.totalorder %s14, 1
      %p65 = scmp.ne.s32.totalorder %s60, %s62
      %p66 = scmp.eq.s32.totalorder %s14, 0
      %p67 = por %p65, %p66
      %p68 = scmp.ne.s32.totalorder %s60, %s62
      %p69 = scmp.eq.s32.totalorder %s19, 1
      %p70 = por %p68, %p69
      %p71 = scmp.ne.s32.totalorder %s62, %s63
      %p72 = scmp.eq.s32.totalorder %s19, 0
      %p73 = por %p71, %p72
      %p74 = scmp.ne.s32.totalorder %s62, %s63
      %p75 = scmp.eq.s32.totalorder %s20, 1
      %p76 = por %p74, %p75
      %p78 = scmp.ne.s32.totalorder %s63, %s77
      %p79 = scmp.eq.s32.totalorder %s20, 0
      %p80 = por %p78, %p79
      %s82 = sadd.s32 %s81, 1
      %p85 = scmp.eq.s32.totalorder %s14, 1
      %p86 = scmp.ne.s32.totalorder %s81, %s83
      %p87 = scmp.eq.s32.totalorder %s14, 0
      %p88 = por %p86, %p87
      %p89 = scmp.ne.s32.totalorder %s81, %s83
      %p90 = scmp.eq.s32.totalorder %s19, 1
      %p91 = por %p89, %p90
      %p92 = scmp.ne.s32.totalorder %s83, %s84
      %p93 = scmp.eq.s32.totalorder %s19, 0
      %p94 = por %p92, %p93
      %p95 = scmp.ne.s32.totalorder %s83, %s84
      %p96 = scmp.eq.s32.totalorder %s20, 1
      %p97 = por %p95, %p96
      %p99 = scmp.ne.s32.totalorder %s84, %s98
      %p100 = scmp.eq.s32.totalorder %s20, 0
      %p101 = por %p99, %p100
      %s102 = ssub.s32 %s21, %s33
      %s103 = ssub.s32 %s22, %s29
      %s104 = sor.u32 %s102, %s103
      %p105 = scmp.eq.s32.totalorder %s104, 0
      %s107 = sadd.s32 %s106, 1
      %s108 = scalar_select %p105, %s106, %s107
      %p111 = pneg %p105
      %p112 = scmp.eq.s32.totalorder %s14, 1
      %p113 = por %p111, %p112
      %p114 = scmp.ne.s32.totalorder %s106, %s109
      %p115 = scmp.eq.s32.totalorder %s14, 0
      %p116 = por %p114, %p115
      %p117 = scmp.ne.s32.totalorder %s106, %s109
      %p118 = scmp.eq.s32.totalorder %s19, 1
      %p119 = por %p117, %p118
      %p120 = scmp.ne.s32.totalorder %s109, %s110
      %p121 = scmp.eq.s32.totalorder %s19, 0
      %p122 = por %p120, %p121
      %p123 = scmp.ne.s32.totalorder %s109, %s110
      %p124 = scmp.eq.s32.totalorder %s20, 1
      %p125 = por %p123, %p124
      %p127 = scmp.ne.s32.totalorder %s110, %s126
      %p128 = scmp.eq.s32.totalorder %s20, 0
      %p129 = por %p127, %p128
      %p130 = scmp.le.s32.totalorder 1, %s14
      %p131 = scmp.lt.s32.totalorder %s14, 3
      %p132 = pnand %p130, %p131
      %p133 = pneg %p132
      // Predicated region
      $region9: #{tpu_custom_call.1} parent=5 // pred_check
        _
      $region10: #{tpu_custom_call.1} parent=5 // pred_check_branch
        %135 = sbr.rel (%p132) target = $region12
      $region11: #{tpu_custom_call.1} parent=5 // pred_region
        %s136 = ssub.s32 %s14, 1
        // Predicated region
        $region13: #{tpu_custom_call.1} parent=11 // pred_check
          %p137 = pneg %p52
        $region14: #{tpu_custom_call.1} parent=11 // pred_check_branch
          %139 = sbr.rel (%p137) target = $region16
        $region15: #{tpu_custom_call.1} parent=11 // pred_region
          %s141 = ssub.s32 1280, 1280
          %142 = vsyncadd [#allocation3], %s141
          %s143 = smul.addr %s23, 20
          %s144 = smul.addr %s143, 64
          %s145 = scalar_lea.hbm %s0, %s144
          %s146 = sshll.u32 [#allocation2], 4
          %s147 = int_to_ptr.vmem [resolvable:$true] %s146
          %152 = dma.hbm_to_vmem [thread:$0]  %s145, 1280, %s147, [#allocation3], 64, 64, 4
        $region16: #{tpu_custom_call.1} parent=11 // pred_fallthru
          _
        // Predicated region
        $region17: #{tpu_custom_call.1} parent=11 // pred_check
          %p153 = pneg %p73
        $region18: #{tpu_custom_call.1} parent=11 // pred_check_branch
          %155 = sbr.rel (%p153) target = $region20
        $region19: #{tpu_custom_call.1} parent=11 // pred_region
          %s157 = ssub.s32 4096, 4096
          %158 = vsyncadd [#allocation6], %s157
          %s159 = sshll.u32 [#allocation5], 4
          %s160 = int_to_ptr.vmem [resolvable:$true] %s159
          %165 = dma.hbm_to_vmem [thread:$0]  %s1, 4096, %s160, [#allocation6], 64, 64, 4
        $region20: #{tpu_custom_call.1} parent=11 // pred_fallthru
          _
        // Predicated region
        $region21: #{tpu_custom_call.1} parent=11 // pred_check
          %p166 = pneg %p94
        $region22: #{tpu_custom_call.1} parent=11 // pred_check_branch
          %168 = sbr.rel (%p166) target = $region24
        $region23: #{tpu_custom_call.1} parent=11 // pred_region
          _
        $region24: #{tpu_custom_call.1} parent=11 // pred_fallthru
          _
      $region12: #{tpu_custom_call.1} parent=5 // pred_fallthru
        _
      %p169 = scmp.lt.s32.totalorder %s14, 2
      // Predicated region
      $region25: #{tpu_custom_call.1} parent=5 // pred_check
        %p170 = pneg %p169
      $region26: #{tpu_custom_call.1} parent=5 // pred_check_branch
        %172 = sbr.rel (%p170) target = $region28
      $region27: #{tpu_custom_call.1} parent=5 // pred_region
        _
      $region28: #{tpu_custom_call.1} parent=5 // pred_fallthru
        _
      %p173 = scmp.le.s32.totalorder 1, %s14
      %p174 = scmp.lt.s32.totalorder %s14, 3
      %p175 = pnand %p173, %p174
      %p176 = pneg %p175
      // Predicated region
      $region29: #{tpu_custom_call.1} parent=5 // pred_check
        _
      $region30: #{tpu_custom_call.1} parent=5 // pred_check_branch
        %178 = sbr.rel (%p175) target = $region32
      $region31: #{tpu_custom_call.1} parent=5 // pred_region
        %s179 = ssub.s32 %s14, 1
        // Predicated region
        $region33: #{tpu_custom_call.1} parent=31 // pred_check
          %p180 = pneg %p52
        $region34: #{tpu_custom_call.1} parent=31 // pred_check_branch
          %182 = sbr.rel (%p180) target = $region36
        $region35: #{tpu_custom_call.1} parent=31 // pred_region
          %183 = dma.done [#allocation3], 1280
        $region36: #{tpu_custom_call.1} parent=31 // pred_fallthru
          _
        // Predicated region
        $region37: #{tpu_custom_call.1} parent=31 // pred_check
          %p184 = pneg %p73
        $region38: #{tpu_custom_call.1} parent=31 // pred_check_branch
          %186 = sbr.rel (%p184) target = $region40
        $region39: #{tpu_custom_call.1} parent=31 // pred_region
          %187 = dma.done [#allocation6], 4096
        $region40: #{tpu_custom_call.1} parent=31 // pred_fallthru
          _
        %p188 = pneg %p52
        %p189 = pneg %p49
        %p190 = pneg %p73
        %p191 = pneg %p70
        %p192 = pneg %p94
        %p193 = pneg %p91
        %p194 = pneg %p122
        %p195 = pneg %p119
        %s196 = sand.u32 %s109, 1
        %s197 = scalar_lea.sflag [#allocation4], %s196
        %s198 = sand.u32 %s109, 1
        %s199 = smul.addr %s198, 128
        %s200 = scalar_lea.vmem [#allocation7], %s199
        %s201 = smul.u32 16, %s24
        %s203 = smul.u32 %s24, 128
        %s204 = sadd.s32 %s203, 16
        %s205 = sshra.s32 %s203, 3
        %s206 = sand.u32 %s203, 7
        %s207 = smul.addr %s205, 4
        %s208 = scalar_lea.vmem [#allocation2], %s207
        %v209 = vld [vmem:[%s208] sm:$0xf]
        %v210 = vld [vmem:[%s208 + $0x4] sm:$0xf]
        %v211 = vld [vmem:[%s208 + $0x8] sm:$0xf]
        %v212 = vld [vmem:[%s208 + $0xc] sm:$0xf]
        %v213 = vld [vmem:[%s208 + $0x10] sm:$0xf]
        %v214 = vld [vmem:[%s208 + $0x14] sm:$0xf]
        %v215 = vld [vmem:[%s208 + $0x18] sm:$0xf]
        %v216 = vld [vmem:[%s208 + $0x1c] sm:$0xf]
        %v217 = vld [vmem:[%s208 + $0x20] sm:$0xf]
        %v218 = vld [vmem:[%s208 + $0x24] sm:$0xf]
        %v219 = vld [vmem:[%s208 + $0x28] sm:$0xf]
        %v220 = vld [vmem:[%s208 + $0x2c] sm:$0xf]
        %v221 = vld [vmem:[%s208 + $0x30] sm:$0xf]
        %v222 = vld [vmem:[%s208 + $0x34] sm:$0xf]
        %v223 = vld [vmem:[%s208 + $0x38] sm:$0xf]
        %v224 = vld [vmem:[%s208 + $0x3c] sm:$0xf]
        %v225 = vld [vmem:[%s208 + $0x40] sm:$0xf]
        %s226 = sshra.s32 %s204, 3
        %s227 = sand.u32 %s204, 7
        %s228 = smul.addr %s226, 4
        %s229 = scalar_lea.vmem [#allocation2], %s228
        %v230 = vld [vmem:[%s229] sm:$0xf]
        %v231 = vld [vmem:[%s229 + $0x4] sm:$0xf]
        %v232 = vld [vmem:[%s229 + $0x8] sm:$0xf]
        %v233 = vld [vmem:[%s229 + $0xc] sm:$0xf]
        %v234 = vld [vmem:[%s229 + $0x10] sm:$0xf]
        %v235 = vld [vmem:[%s229 + $0x14] sm:$0xf]
        %v236 = vld [vmem:[%s229 + $0x18] sm:$0xf]
        %v237 = vld [vmem:[%s229 + $0x1c] sm:$0xf]
        %v238 = vld [vmem:[%s229 + $0x20] sm:$0xf]
        %v239 = vld [vmem:[%s229 + $0x24] sm:$0xf]
        %v240 = vld [vmem:[%s229 + $0x28] sm:$0xf]
        %v241 = vld [vmem:[%s229 + $0x2c] sm:$0xf]
        %v242 = vld [vmem:[%s229 + $0x30] sm:$0xf]
        %v243 = vld [vmem:[%s229 + $0x34] sm:$0xf]
        %v244 = vld [vmem:[%s229 + $0x38] sm:$0xf]
        %v245 = vld [vmem:[%s229 + $0x3c] sm:$0xf]
        %v246 = vld [vmem:[%s229 + $0x40] sm:$0xf]
        %v263 = vunpack.c.l.b16 %v209
        %v264 = vunpack.c.l.b16 %v210
        %v265 = vunpack.c.l.b16 %v211
        %v266 = vunpack.c.l.b16 %v212
        %v267 = vunpack.c.l.b16 %v213
        %v268 = vunpack.c.l.b16 %v214
        %v269 = vunpack.c.l.b16 %v215
        %v270 = vunpack.c.l.b16 %v216
        %v271 = vunpack.c.l.b16 %v217
        %v272 = vunpack.c.l.b16 %v218
        %v273 = vunpack.c.l.b16 %v219
        %v274 = vunpack.c.l.b16 %v220
        %v275 = vunpack.c.l.b16 %v221
        %v276 = vunpack.c.l.b16 %v222
        %v277 = vunpack.c.l.b16 %v223
        %v278 = vunpack.c.l.b16 %v224
        %v279 = vpack.c.b16 %v264, %v263
        %v280 = vpack.c.b16 %v266, %v265
        %v281 = vpack.c.b16 %v268, %v267
        %v282 = vpack.c.b16 %v270, %v269
        %v283 = vpack.c.b16 %v272, %v271
        %v284 = vpack.c.b16 %v274, %v273
        %v285 = vpack.c.b16 %v276, %v275
        %v286 = vpack.c.b16 %v278, %v277
        %v296 = vunpack.c.l.b16 %v225
        %v297 = vpack.c.b16 %v296, %v296
        %vm298 = vsmask.f32 7424
        %v300 = vshrl.u32 %v279, 16
        %v302 = vshll.u32 %v279, 16
        %v304 = vrot.slane %v302, 1
        %v305 = vor.u32 %v300, %v304
        %v307 = vshll.u32 %v280, 16
        %v309 = vrot.slane %v307, 1
        %v310 = vsel %vm298, %v305, %v309
        %v311 = vshrl.u32 %v280, 16
        %v313 = vor.u32 %v311, %v309
        %v315 = vshll.u32 %v281, 16
        %v317 = vrot.slane %v315, 1
        %v318 = vsel %vm298, %v313, %v317
        %v319 = vshrl.u32 %v281, 16
        %v321 = vor.u32 %v319, %v317
        %v323 = vshll.u32 %v282, 16
        %v325 = vrot.slane %v323, 1
        %v326 = vsel %vm298, %v321, %v325
        %v327 = vshrl.u32 %v282, 16
        %v329 = vor.u32 %v327, %v325
        %v331 = vshll.u32 %v283, 16
        %v333 = vrot.slane %v331, 1
        %v334 = vsel %vm298, %v329, %v333
        %v335 = vshrl.u32 %v283, 16
        %v337 = vor.u32 %v335, %v333
        %v339 = vshll.u32 %v284, 16
        %v341 = vrot.slane %v339, 1
        %v342 = vsel %vm298, %v337, %v341
        %v343 = vshrl.u32 %v284, 16
        %v345 = vor.u32 %v343, %v341
        %v347 = vshll.u32 %v285, 16
        %v349 = vrot.slane %v347, 1
        %v350 = vsel %vm298, %v345, %v349
        %v351 = vshrl.u32 %v285, 16
        %v353 = vor.u32 %v351, %v349
        %v355 = vshll.u32 %v286, 16
        %v357 = vrot.slane %v355, 1
        %v358 = vsel %vm298, %v353, %v357
        %v359 = vshrl.u32 %v286, 16
        %v361 = vor.u32 %v359, %v357
        %v363 = vshll.u32 %v297, 16
        %v365 = vrot.slane %v363, 1
        %v366 = vsel %vm298, %v361, %v365
        %v391 = vunpack.c.l.b16 %v230
        %v392 = vunpack.c.l.b16 %v231
        %v393 = vunpack.c.l.b16 %v232
        %v394 = vunpack.c.l.b16 %v233
        %v395 = vunpack.c.l.b16 %v234
        %v396 = vunpack.c.l.b16 %v235
        %v397 = vunpack.c.l.b16 %v236
        %v398 = vunpack.c.l.b16 %v237
        %v399 = vunpack.c.l.b16 %v238
        %v400 = vunpack.c.l.b16 %v239
        %v401 = vunpack.c.l.b16 %v240
        %v402 = vunpack.c.l.b16 %v241
        %v403 = vunpack.c.l.b16 %v242
        %v404 = vunpack.c.l.b16 %v243
        %v405 = vunpack.c.l.b16 %v244
        %v406 = vunpack.c.l.b16 %v245
        %v407 = vpack.c.b16 %v392, %v391
        %v408 = vpack.c.b16 %v394, %v393
        %v409 = vpack.c.b16 %v396, %v395
        %v410 = vpack.c.b16 %v398, %v397
        %v411 = vpack.c.b16 %v400, %v399
        %v412 = vpack.c.b16 %v402, %v401
        %v413 = vpack.c.b16 %v404, %v403
        %v414 = vpack.c.b16 %v406, %v405
        %v424 = vunpack.c.l.b16 %v246
        %v425 = vpack.c.b16 %v424, %v424
        %v427 = vshrl.u32 %v407, 16
        %v429 = vshll.u32 %v407, 16
        %v431 = vrot.slane %v429, 1
        %v432 = vor.u32 %v427, %v431
        %v434 = vshll.u32 %v408, 16
        %v436 = vrot.slane %v434, 1
        %v437 = vsel %vm298, %v432, %v436
        %v438 = vshrl.u32 %v408, 16
        %v440 = vor.u32 %v438, %v436
        %v442 = vshll.u32 %v409, 16
        %v444 = vrot.slane %v442, 1
        %v445 = vsel %vm298, %v440, %v444
        %v446 = vshrl.u32 %v409, 16
        %v448 = vor.u32 %v446, %v444
        %v450 = vshll.u32 %v410, 16
        %v452 = vrot.slane %v450, 1
        %v453 = vsel %vm298, %v448, %v452
        %v454 = vshrl.u32 %v410, 16
        %v456 = vor.u32 %v454, %v452
        %v458 = vshll.u32 %v411, 16
        %v460 = vrot.slane %v458, 1
        %v461 = vsel %vm298, %v456, %v460
        %v462 = vshrl.u32 %v411, 16
        %v464 = vor.u32 %v462, %v460
        %v466 = vshll.u32 %v412, 16
        %v468 = vrot.slane %v466, 1
        %v469 = vsel %vm298, %v464, %v468
        %v470 = vshrl.u32 %v412, 16
        %v472 = vor.u32 %v470, %v468
        %v474 = vshll.u32 %v413, 16
        %v476 = vrot.slane %v474, 1
        %v477 = vsel %vm298, %v472, %v476
        %v478 = vshrl.u32 %v413, 16
        %v480 = vor.u32 %v478, %v476
        %v482 = vshll.u32 %v414, 16
        %v484 = vrot.slane %v482, 1
        %v485 = vsel %vm298, %v480, %v484
        %v486 = vshrl.u32 %v414, 16
        %v488 = vor.u32 %v486, %v484
        %v490 = vshll.u32 %v425, 16
        %v492 = vrot.slane %v490, 1
        %v493 = vsel %vm298, %v488, %v492
        %v502 = vld [vmem:[#allocation5] sm:$0xf]
        %v503 = vld [vmem:[#allocation5 + $0x4] sm:$0xf]
        %v504 = vld [vmem:[#allocation5 + $0x8] sm:$0xf]
        %v505 = vld [vmem:[#allocation5 + $0xc] sm:$0xf]
        %v506 = vld [vmem:[#allocation5 + $0x10] sm:$0xf]
        %v507 = vld [vmem:[#allocation5 + $0x14] sm:$0xf]
        %v508 = vld [vmem:[#allocation5 + $0x18] sm:$0xf]
        %v509 = vld [vmem:[#allocation5 + $0x1c] sm:$0xf]
        %v510 = vld [vmem:[#allocation5 + $0x20] sm:$0xf]
        %v511 = vld [vmem:[#allocation5 + $0x24] sm:$0xf]
        %v512 = vld [vmem:[#allocation5 + $0x28] sm:$0xf]
        %v513 = vld [vmem:[#allocation5 + $0x2c] sm:$0xf]
        %v514 = vld [vmem:[#allocation5 + $0x30] sm:$0xf]
        %v515 = vld [vmem:[#allocation5 + $0x34] sm:$0xf]
        %v516 = vld [vmem:[#allocation5 + $0x38] sm:$0xf]
        %v517 = vld [vmem:[#allocation5 + $0x3c] sm:$0xf]
        %v518 = vld [vmem:[#allocation5 + $0x40] sm:$0xf]
        %v519 = vld [vmem:[#allocation5 + $0x44] sm:$0xf]
        %v520 = vld [vmem:[#allocation5 + $0x48] sm:$0xf]
        %v521 = vld [vmem:[#allocation5 + $0x4c] sm:$0xf]
        %v522 = vld [vmem:[#allocation5 + $0x50] sm:$0xf]
        %v523 = vld [vmem:[#allocation5 + $0x54] sm:$0xf]
        %v524 = vld [vmem:[#allocation5 + $0x58] sm:$0xf]
        %v525 = vld [vmem:[#allocation5 + $0x5c] sm:$0xf]
        %v526 = vld [vmem:[#allocation5 + $0x60] sm:$0xf]
        %v527 = vld [vmem:[#allocation5 + $0x64] sm:$0xf]
        %v528 = vld [vmem:[#allocation5 + $0x68] sm:$0xf]
        %v529 = vld [vmem:[#allocation5 + $0x6c] sm:$0xf]
        %v530 = vld [vmem:[#allocation5 + $0x70] sm:$0xf]
        %v531 = vld [vmem:[#allocation5 + $0x74] sm:$0xf]
        %v532 = vld [vmem:[#allocation5 + $0x78] sm:$0xf]
        %v533 = vld [vmem:[#allocation5 + $0x7c] sm:$0xf]
        %v534 = vld [vmem:[#allocation5 + $0x80] sm:$0xf]
        %v535 = vld [vmem:[#allocation5 + $0x84] sm:$0xf]
        %v536 = vld [vmem:[#allocation5 + $0x88] sm:$0xf]
        %v537 = vld [vmem:[#allocation5 + $0x8c] sm:$0xf]
        %v538 = vld [vmem:[#allocation5 + $0x90] sm:$0xf]
        %v539 = vld [vmem:[#allocation5 + $0x94] sm:$0xf]
        %v540 = vld [vmem:[#allocation5 + $0x98] sm:$0xf]
        %v541 = vld [vmem:[#allocation5 + $0x9c] sm:$0xf]
        %v542 = vld [vmem:[#allocation5 + $0xa0] sm:$0xf]
        %v543 = vld [vmem:[#allocation5 + $0xa4] sm:$0xf]
        %v544 = vld [vmem:[#allocation5 + $0xa8] sm:$0xf]
        %v545 = vld [vmem:[#allocation5 + $0xac] sm:$0xf]
        %v546 = vld [vmem:[#allocation5 + $0xb0] sm:$0xf]
        %v547 = vld [vmem:[#allocation5 + $0xb4] sm:$0xf]
        %v548 = vld [vmem:[#allocation5 + $0xb8] sm:$0xf]
        %v549 = vld [vmem:[#allocation5 + $0xbc] sm:$0xf]
        %v550 = vld [vmem:[#allocation5 + $0xc0] sm:$0xf]
        %v551 = vld [vmem:[#allocation5 + $0xc4] sm:$0xf]
        %v552 = vld [vmem:[#allocation5 + $0xc8] sm:$0xf]
        %v553 = vld [vmem:[#allocation5 + $0xcc] sm:$0xf]
        %v554 = vld [vmem:[#allocation5 + $0xd0] sm:$0xf]
        %v555 = vld [vmem:[#allocation5 + $0xd4] sm:$0xf]
        %v556 = vld [vmem:[#allocation5 + $0xd8] sm:$0xf]
        %v557 = vld [vmem:[#allocation5 + $0xdc] sm:$0xf]
        %v558 = vld [vmem:[#allocation5 + $0xe0] sm:$0xf]
        %v559 = vld [vmem:[#allocation5 + $0xe4] sm:$0xf]
        %v560 = vld [vmem:[#allocation5 + $0xe8] sm:$0xf]
        %v561 = vld [vmem:[#allocation5 + $0xec] sm:$0xf]
        %v562 = vld [vmem:[#allocation5 + $0xf0] sm:$0xf]
        %v563 = vld [vmem:[#allocation5 + $0xf4] sm:$0xf]
        %v564 = vld [vmem:[#allocation5 + $0xf8] sm:$0xf]
        %v565 = vld [vmem:[#allocation5 + $0xfc] sm:$0xf]
        %v566 = vld [vmem:[%s2] sm:$0x1]
        %v568 = vlaneseq
        %v569 = vshrl.u32 %v568, 7
        %v570 = vsub.s32 0, %v569
        %v571 = vrot.slane %v566, %v570
        %v637 = vunpack.c.l.b16 %v502
        %v638 = vunpack.c.l.b16 %v503
        %v639 = vunpack.c.l.b16 %v504
        %v640 = vunpack.c.l.b16 %v505
        %v641 = vunpack.c.l.b16 %v506
        %v642 = vunpack.c.l.b16 %v507
        %v643 = vunpack.c.l.b16 %v508
        %v644 = vunpack.c.l.b16 %v509
        %v645 = vunpack.c.l.b16 %v510
        %v646 = vunpack.c.l.b16 %v511
        %v647 = vunpack.c.l.b16 %v512
        %v648 = vunpack.c.l.b16 %v513
        %v649 = vunpack.c.l.b16 %v514
        %v650 = vunpack.c.l.b16 %v515
        %v651 = vunpack.c.l.b16 %v516
        %v652 = vunpack.c.l.b16 %v517
        %v653 = vunpack.c.l.b16 %v518
        %v654 = vunpack.c.l.b16 %v519
        %v655 = vunpack.c.l.b16 %v520
        %v656 = vunpack.c.l.b16 %v521
        %v657 = vunpack.c.l.b16 %v522
        %v658 = vunpack.c.l.b16 %v523
        %v659 = vunpack.c.l.b16 %v524
        %v660 = vunpack.c.l.b16 %v525
        %v661 = vunpack.c.l.b16 %v526
        %v662 = vunpack.c.l.b16 %v527
        %v663 = vunpack.c.l.b16 %v528
        %v664 = vunpack.c.l.b16 %v529
        %v665 = vunpack.c.l.b16 %v530
        %v666 = vunpack.c.l.b16 %v531
        %v667 = vunpack.c.l.b16 %v532
        %v668 = vunpack.c.l.b16 %v533
        %v669 = vunpack.c.l.b16 %v534
        %v670 = vunpack.c.l.b16 %v535
        %v671 = vunpack.c.l.b16 %v536
        %v672 = vunpack.c.l.b16 %v537
        %v673 = vunpack.c.l.b16 %v538
        %v674 = vunpack.c.l.b16 %v539
        %v675 = vunpack.c.l.b16 %v540
        %v676 = vunpack.c.l.b16 %v541
        %v677 = vunpack.c.l.b16 %v542
        %v678 = vunpack.c.l.b16 %v543
        %v679 = vunpack.c.l.b16 %v544
        %v680 = vunpack.c.l.b16 %v545
        %v681 = vunpack.c.l.b16 %v546
        %v682 = vunpack.c.l.b16 %v547
        %v683 = vunpack.c.l.b16 %v548
        %v684 = vunpack.c.l.b16 %v549
        %v685 = vunpack.c.l.b16 %v550
        %v686 = vunpack.c.l.b16 %v551
        %v687 = vunpack.c.l.b16 %v552
        %v688 = vunpack.c.l.b16 %v553
        %v689 = vunpack.c.l.b16 %v554
        %v690 = vunpack.c.l.b16 %v555
        %v691 = vunpack.c.l.b16 %v556
        %v692 = vunpack.c.l.b16 %v557
        %v693 = vunpack.c.l.b16 %v558
        %v694 = vunpack.c.l.b16 %v559
        %v695 = vunpack.c.l.b16 %v560
        %v696 = vunpack.c.l.b16 %v561
        %v697 = vunpack.c.l.b16 %v562
        %v698 = vunpack.c.l.b16 %v563
        %v699 = vunpack.c.l.b16 %v564
        %v700 = vunpack.c.l.b16 %v565
        %v701 = vpack.c.b16 %v638, %v637
        %v702 = vpack.c.b16 %v640, %v639
        %v703 = vpack.c.b16 %v642, %v641
        %v704 = vpack.c.b16 %v644, %v643
        %v705 = vpack.c.b16 %v646, %v645
        %v706 = vpack.c.b16 %v648, %v647
        %v707 = vpack.c.b16 %v650, %v649
        %v708 = vpack.c.b16 %v652, %v651
        %v709 = vpack.c.b16 %v654, %v653
        %v710 = vpack.c.b16 %v656, %v655
        %v711 = vpack.c.b16 %v658, %v657
        %v712 = vpack.c.b16 %v660, %v659
        %v713 = vpack.c.b16 %v662, %v661
        %v714 = vpack.c.b16 %v664, %v663
        %v715 = vpack.c.b16 %v666, %v665
        %v716 = vpack.c.b16 %v668, %v667
        %v717 = vpack.c.b16 %v670, %v669
        %v718 = vpack.c.b16 %v672, %v671
        %v719 = vpack.c.b16 %v674, %v673
        %v720 = vpack.c.b16 %v676, %v675
        %v721 = vpack.c.b16 %v678, %v677
        %v722 = vpack.c.b16 %v680, %v679
        %v723 = vpack.c.b16 %v682, %v681
        %v724 = vpack.c.b16 %v684, %v683
        %v725 = vpack.c.b16 %v686, %v685
        %v726 = vpack.c.b16 %v688, %v687
        %v727 = vpack.c.b16 %v690, %v689
        %v728 = vpack.c.b16 %v692, %v691
        %v729 = vpack.c.b16 %v694, %v693
        %v730 = vpack.c.b16 %v696, %v695
        %v731 = vpack.c.b16 %v698, %v697
        %v732 = vpack.c.b16 %v700, %v699
        %765 = vmatprep.subr.bf16.mxu0 0
        %766 = vmatpush1.bf16.msra.mxu0 %v708
        %767 = vmatprep.subr.bf16.mxu0 0
        %768 = vmatpush1.bf16.msra.mxu0 %v707
        %769 = vmatprep.subr.bf16.mxu0 0
        %770 = vmatpush1.bf16.msra.mxu0 %v706
        %771 = vmatprep.subr.bf16.mxu0 0
        %772 = vmatpush1.bf16.msra.mxu0 %v705
        %773 = vmatprep.subr.bf16.mxu0 0
        %774 = vmatpush1.bf16.msra.mxu0 %v704
        %775 = vmatprep.subr.bf16.mxu0 0
        %776 = vmatpush1.bf16.msra.mxu0 %v703
        %777 = vmatprep.subr.bf16.mxu0 0
        %778 = vmatpush1.bf16.msra.mxu0 %v702
        %779 = vmatprep.subr.bf16.mxu0 0
        %780 = vmatpush1.bf16.msra.mxu0 %v701
        %781 = vmatprep.subr.bf16.mxu0 0
        %782 = vmatpush2.bf16.msra.mxu0 %v716
        %783 = vmatprep.subr.bf16.mxu0 0
        %784 = vmatpush2.bf16.msra.mxu0 %v715
        %785 = vmatprep.subr.bf16.mxu0 0
        %786 = vmatpush2.bf16.msra.mxu0 %v714
        %787 = vmatprep.subr.bf16.mxu0 0
        %788 = vmatpush2.bf16.msra.mxu0 %v713
        %789 = vmatprep.subr.bf16.mxu0 0
        %790 = vmatpush2.bf16.msra.mxu0 %v712
        %791 = vmatprep.subr.bf16.mxu0 0
        %792 = vmatpush2.bf16.msra.mxu0 %v711
        %793 = vmatprep.subr.bf16.mxu0 0
        %794 = vmatpush2.bf16.msra.mxu0 %v710
        %795 = vmatprep.subr.bf16.mxu0 0
        %796 = vmatpush2.bf16.msra.mxu0 %v709
        %797 = vmatprep.mubr.bf16.mxu0 %v310
        %798 = vmatmul.mubr.bf16.gmra.mxu0 %v279
        %v799 = vpop.f32.mrf.mxu0
        %v800 = vadd.f32 %v571, %v799
        %v801 = vpop.f32.mrf.mxu0
        %v802 = vpop.f32.mrf.mxu0
        %v803 = vadd.f32 %v571, %v802
        %v804 = vpop.f32.mrf.mxu0
        %805 = vmatprep.mubr.bf16.mxu0 %v318
        %806 = vmatmul.mubr.bf16.gmra.mxu0 %v280
        %v807 = vpop.f32.mrf.mxu0
        %v808 = vadd.f32 %v571, %v807
        %v809 = vpop.f32.mrf.mxu0
        %v810 = vpop.f32.mrf.mxu0
        %v811 = vadd.f32 %v571, %v810
        %v812 = vpop.f32.mrf.mxu0
        %813 = vmatprep.mubr.bf16.mxu0 %v326
        %814 = vmatmul.mubr.bf16.gmra.mxu0 %v281
        %v815 = vpop.f32.mrf.mxu0
        %v816 = vadd.f32 %v571, %v815
        %v817 = vpop.f32.mrf.mxu0
        %v818 = vpop.f32.mrf.mxu0
        %v819 = vadd.f32 %v571, %v818
        %v820 = vpop.f32.mrf.mxu0
        %821 = vmatprep.mubr.bf16.mxu0 %v334
        %822 = vmatmul.mubr.bf16.gmra.mxu0 %v282
        %v823 = vpop.f32.mrf.mxu0
        %v824 = vadd.f32 %v571, %v823
        %v825 = vpop.f32.mrf.mxu0
        %v826 = vpop.f32.mrf.mxu0
        %v827 = vadd.f32 %v571, %v826
        %v828 = vpop.f32.mrf.mxu0
        %829 = vmatprep.mubr.bf16.mxu0 %v342
        %830 = vmatmul.mubr.bf16.gmra.mxu0 %v283
        %v831 = vpop.f32.mrf.mxu0
        %v832 = vadd.f32 %v571, %v831
        %v833 = vpop.f32.mrf.mxu0
        %v834 = vpop.f32.mrf.mxu0
        %v835 = vadd.f32 %v571, %v834
        %v836 = vpop.f32.mrf.mxu0
        %837 = vmatprep.mubr.bf16.mxu0 %v350
        %838 = vmatmul.mubr.bf16.gmra.mxu0 %v284
        %v839 = vpop.f32.mrf.mxu0
        %v840 = vadd.f32 %v571, %v839
        %v841 = vpop.f32.mrf.mxu0
        %v842 = vpop.f32.mrf.mxu0
        %v843 = vadd.f32 %v571, %v842
        %v844 = vpop.f32.mrf.mxu0
        %845 = vmatprep.mubr.bf16.mxu0 %v358
        %846 = vmatmul.mubr.bf16.gmra.mxu0 %v285
        %v847 = vpop.f32.mrf.mxu0
        %v848 = vadd.f32 %v571, %v847
        %v849 = vpop.f32.mrf.mxu0
        %v850 = vpop.f32.mrf.mxu0
        %v851 = vadd.f32 %v571, %v850
        %v852 = vpop.f32.mrf.mxu0
        %853 = vmatprep.mubr.bf16.mxu0 %v366
        %854 = vmatmul.mubr.bf16.gmra.mxu0 %v286
        %v855 = vpop.f32.mrf.mxu0
        %v856 = vadd.f32 %v571, %v855
        %v857 = vpop.f32.mrf.mxu0
        %v858 = vpop.f32.mrf.mxu0
        %v859 = vadd.f32 %v571, %v858
        %v860 = vpop.f32.mrf.mxu0
        %861 = vdwg.mxu0
        %862 = vmatprep.subr.bf16.mxu0 0
        %863 = vmatpush1.bf16.msra.mxu0 %v724
        %864 = vmatprep.subr.bf16.mxu0 0
        %865 = vmatpush1.bf16.msra.mxu0 %v723
        %866 = vmatprep.subr.bf16.mxu0 0
        %867 = vmatpush1.bf16.msra.mxu0 %v722
        %868 = vmatprep.subr.bf16.mxu0 0
        %869 = vmatpush1.bf16.msra.mxu0 %v721
        %870 = vmatprep.subr.bf16.mxu0 0
        %871 = vmatpush1.bf16.msra.mxu0 %v720
        %872 = vmatprep.subr.bf16.mxu0 0
        %873 = vmatpush1.bf16.msra.mxu0 %v719
        %874 = vmatprep.subr.bf16.mxu0 0
        %875 = vmatpush1.bf16.msra.mxu0 %v718
        %876 = vmatprep.subr.bf16.mxu0 0
        %877 = vmatpush1.bf16.msra.mxu0 %v717
        %878 = vmatprep.subr.bf16.mxu0 0
        %879 = vmatpush2.bf16.msra.mxu0 %v732
        %880 = vmatprep.subr.bf16.mxu0 0
        %881 = vmatpush2.bf16.msra.mxu0 %v731
        %882 = vmatprep.subr.bf16.mxu0 0
        %883 = vmatpush2.bf16.msra.mxu0 %v730
        %884 = vmatprep.subr.bf16.mxu0 0
        %885 = vmatpush2.bf16.msra.mxu0 %v729
        %886 = vmatprep.subr.bf16.mxu0 0
        %887 = vmatpush2.bf16.msra.mxu0 %v728
        %888 = vmatprep.subr.bf16.mxu0 0
        %889 = vmatpush2.bf16.msra.mxu0 %v727
        %890 = vmatprep.subr.bf16.mxu0 0
        %891 = vmatpush2.bf16.msra.mxu0 %v726
        %892 = vmatprep.subr.bf16.mxu0 0
        %893 = vmatpush2.bf16.msra.mxu0 %v725
        %894 = vmatprep.mubr.bf16.mxu0 %v437
        %895 = vmatmul.mubr.bf16.gmra.mxu0 %v407
        %v896 = vpop.f32.mrf.mxu0
        %v897 = vadd.f32 %v800, %v896
        %v898 = vpop.f32.mrf.mxu0
        %v899 = vpop.f32.mrf.mxu0
        %v900 = vadd.f32 %v803, %v899
        %v901 = vpop.f32.mrf.mxu0
        %902 = vmatprep.mubr.bf16.mxu0 %v445
        %903 = vmatmul.mubr.bf16.gmra.mxu0 %v408
        %v904 = vpop.f32.mrf.mxu0
        %v905 = vadd.f32 %v808, %v904
        %v906 = vpop.f32.mrf.mxu0
        %v907 = vpop.f32.mrf.mxu0
        %v908 = vadd.f32 %v811, %v907
        %v909 = vpop.f32.mrf.mxu0
        %910 = vmatprep.mubr.bf16.mxu0 %v453
        %911 = vmatmul.mubr.bf16.gmra.mxu0 %v409
        %v912 = vpop.f32.mrf.mxu0
        %v913 = vadd.f32 %v816, %v912
        %v914 = vpop.f32.mrf.mxu0
        %v915 = vpop.f32.mrf.mxu0
        %v916 = vadd.f32 %v819, %v915
        %v917 = vpop.f32.mrf.mxu0
        %918 = vmatprep.mubr.bf16.mxu0 %v461
        %919 = vmatmul.mubr.bf16.gmra.mxu0 %v410
        %v920 = vpop.f32.mrf.mxu0
        %v921 = vadd.f32 %v824, %v920
        %v922 = vpop.f32.mrf.mxu0
        %v923 = vpop.f32.mrf.mxu0
        %v924 = vadd.f32 %v827, %v923
        %v925 = vpop.f32.mrf.mxu0
        %926 = vmatprep.mubr.bf16.mxu0 %v469
        %927 = vmatmul.mubr.bf16.gmra.mxu0 %v411
        %v928 = vpop.f32.mrf.mxu0
        %v929 = vadd.f32 %v832, %v928
        %v930 = vpop.f32.mrf.mxu0
        %v931 = vpop.f32.mrf.mxu0
        %v932 = vadd.f32 %v835, %v931
        %v933 = vpop.f32.mrf.mxu0
        %934 = vmatprep.mubr.bf16.mxu0 %v477
        %935 = vmatmul.mubr.bf16.gmra.mxu0 %v412
        %v936 = vpop.f32.mrf.mxu0
        %v937 = vadd.f32 %v840, %v936
        %v938 = vpop.f32.mrf.mxu0
        %v939 = vpop.f32.mrf.mxu0
        %v940 = vadd.f32 %v843, %v939
        %v941 = vpop.f32.mrf.mxu0
        %942 = vmatprep.mubr.bf16.mxu0 %v485
        %943 = vmatmul.mubr.bf16.gmra.mxu0 %v413
        %v944 = vpop.f32.mrf.mxu0
        %v945 = vadd.f32 %v848, %v944
        %v946 = vpop.f32.mrf.mxu0
        %v947 = vpop.f32.mrf.mxu0
        %v948 = vadd.f32 %v851, %v947
        %v949 = vpop.f32.mrf.mxu0
        %950 = vmatprep.mubr.bf16.mxu0 %v493
        %951 = vmatmul.mubr.bf16.gmra.mxu0 %v414
        %v952 = vpop.f32.mrf.mxu0
        %v953 = vadd.f32 %v856, %v952
        %v954 = vpop.f32.mrf.mxu0
        %v955 = vpop.f32.mrf.mxu0
        %v956 = vadd.f32 %v859, %v955
        %v957 = vpop.f32.mrf.mxu0
        %958 = vdwg.mxu0
        %vm959 = vcmp.ge.f32.partialorder %v897, 0.0
        %vm960 = vcmp.ge.f32.partialorder %v900, 0.0
        %vm961 = vcmp.ge.f32.partialorder %v905, 0.0
        %vm962 = vcmp.ge.f32.partialorder %v908, 0.0
        %vm963 = vcmp.ge.f32.partialorder %v913, 0.0
        %vm964 = vcmp.ge.f32.partialorder %v916, 0.0
        %vm965 = vcmp.ge.f32.partialorder %v921, 0.0
        %vm966 = vcmp.ge.f32.partialorder %v924, 0.0
        %vm967 = vcmp.ge.f32.partialorder %v929, 0.0
        %vm968 = vcmp.ge.f32.partialorder %v932, 0.0
        %vm969 = vcmp.ge.f32.partialorder %v937, 0.0
        %vm970 = vcmp.ge.f32.partialorder %v940, 0.0
        %vm971 = vcmp.ge.f32.partialorder %v945, 0.0
        %vm972 = vcmp.ge.f32.partialorder %v948, 0.0
        %vm973 = vcmp.ge.f32.partialorder %v953, 0.0
        %vm974 = vcmp.ge.f32.partialorder %v956, 0.0
        %v975 = vmul.f32 %v897, 0.2
        %v976 = vmul.f32 %v900, 0.2
        %v977 = vmul.f32 %v905, 0.2
        %v978 = vmul.f32 %v908, 0.2
        %v979 = vmul.f32 %v913, 0.2
        %v980 = vmul.f32 %v916, 0.2
        %v981 = vmul.f32 %v921, 0.2
        %v982 = vmul.f32 %v924, 0.2
        %v983 = vmul.f32 %v929, 0.2
        %v984 = vmul.f32 %v932, 0.2
        %v985 = vmul.f32 %v937, 0.2
        %v986 = vmul.f32 %v940, 0.2
        %v987 = vmul.f32 %v945, 0.2
        %v988 = vmul.f32 %v948, 0.2
        %v989 = vmul.f32 %v953, 0.2
        %v990 = vmul.f32 %v956, 0.2
        %v991 = vsel %vm959, %v897, %v975
        %v992 = vsel %vm960, %v900, %v976
        %v993 = vsel %vm961, %v905, %v977
        %v994 = vsel %vm962, %v908, %v978
        %v995 = vsel %vm963, %v913, %v979
        %v996 = vsel %vm964, %v916, %v980
        %v997 = vsel %vm965, %v921, %v981
        %v998 = vsel %vm966, %v924, %v982
        %v999 = vsel %vm967, %v929, %v983
        %v1000 = vsel %vm968, %v932, %v984
        %v1001 = vsel %vm969, %v937, %v985
        %v1002 = vsel %vm970, %v940, %v986
        %v1003 = vsel %vm971, %v945, %v987
        %v1004 = vsel %vm972, %v948, %v988
        %v1005 = vsel %vm973, %v953, %v989
        %v1006 = vsel %vm974, %v956, %v990
        %1007 = vst [vmem:[%s200] sm:$0xff] %v991
        %1008 = vst [vmem:[%s200 + $0x8] sm:$0xff] %v992
        %1009 = vst [vmem:[%s200 + $0x10] sm:$0xff] %v993
        %1010 = vst [vmem:[%s200 + $0x18] sm:$0xff] %v994
        %1011 = vst [vmem:[%s200 + $0x20] sm:$0xff] %v995
        %1012 = vst [vmem:[%s200 + $0x28] sm:$0xff] %v996
        %1013 = vst [vmem:[%s200 + $0x30] sm:$0xff] %v997
        %1014 = vst [vmem:[%s200 + $0x38] sm:$0xff] %v998
        %1015 = vst [vmem:[%s200 + $0x40] sm:$0xff] %v999
        %1016 = vst [vmem:[%s200 + $0x48] sm:$0xff] %v1000
        %1017 = vst [vmem:[%s200 + $0x50] sm:$0xff] %v1001
        %1018 = vst [vmem:[%s200 + $0x58] sm:$0xff] %v1002
        %1019 = vst [vmem:[%s200 + $0x60] sm:$0xff] %v1003
        %1020 = vst [vmem:[%s200 + $0x68] sm:$0xff] %v1004
        %1021 = vst [vmem:[%s200 + $0x70] sm:$0xff] %v1005
        %1022 = vst [vmem:[%s200 + $0x78] sm:$0xff] %v1006
        %s1023 = sand.u32 %s109, 1
        %s1024 = scalar_lea.sflag [#allocation4], %s1023
        %s1025 = sand.u32 %s109, 1
        %s1026 = smul.addr %s1025, 128
        %s1027 = scalar_lea.vmem [#allocation7], %s1026
        // Predicated region
        $region41: #{tpu_custom_call.1} parent=31 // pred_check
          %p1028 = pneg %p119
        $region42: #{tpu_custom_call.1} parent=31 // pred_check_branch
          %1030 = sbr.rel (%p1028) target = $region44
        $region43: #{tpu_custom_call.1} parent=31 // pred_region
          %s1031 = smul.u32 16, %s24
          %s1033 = ssub.s32 2048, 2048
          %1034 = vsyncadd %s1024, %s1033
          %s1035 = smul.addr %s23, 16
          %s1036 = sadd.s32 %s1031, %s1035
          %s1037 = smul.addr %s1036, 128
          %s1038 = scalar_lea.hbm %s3, %s1037
          %s1039 = sshll.u32 %s1027, 4
          %s1040 = int_to_ptr.vmem [resolvable:$true] %s1039
          %1045 = dma.vmem_to_hbm [thread:$0]  %s1040, 2048, %s1038, %s1024, 128, 128, 8
        $region44: #{tpu_custom_call.1} parent=31 // pred_fallthru
          _
      $region32: #{tpu_custom_call.1} parent=5 // pred_fallthru
        _
      %p1046 = scmp.le.s32.totalorder 2, %s14
      // Predicated region
      $region45: #{tpu_custom_call.1} parent=5 // pred_check
        %p1047 = pneg %p1046
      $region46: #{tpu_custom_call.1} parent=5 // pred_check_branch
        %1049 = sbr.rel (%p1047) target = $region48
      $region47: #{tpu_custom_call.1} parent=5 // pred_region
        %s1050 = ssub.s32 %s14, 2
        // Predicated region
        $region49: #{tpu_custom_call.1} parent=47 // pred_check
          %p1051 = pneg %p125
        $region50: #{tpu_custom_call.1} parent=47 // pred_check_branch
          %1053 = sbr.rel (%p1051) target = $region52
        $region51: #{tpu_custom_call.1} parent=47 // pred_region
          %s1054 = sand.u32 %s110, 1
          %s1055 = scalar_lea.sflag [#allocation4], %s1054
          %s1056 = sand.u32 %s110, 1
          %s1057 = smul.addr %s1056, 128
          %s1058 = scalar_lea.vmem [#allocation7], %s1057
          %1059 = dma.done %s1055, 2048
        $region52: #{tpu_custom_call.1} parent=47 // pred_fallthru
          _
      $region48: #{tpu_custom_call.1} parent=5 // pred_fallthru
        _
    $region6: #{tpu_custom_call.1} parent=1 // loop_footer
      %s18 = sadd.s32 1, %s14
    $region7: #{tpu_custom_call.1} parent=1 // loop_footer_branch
      %13 = sbr.rel target = $region3
    $region8: #{tpu_custom_call.1} parent=1 // loop_exit
      _
    %1060 = vsyncpa [#allocation3], 1
    %s1061 = scalar_lea.sflag [#allocation3], 1
    %1062 = vsyncpa %s1061, 1
    %1063 = vsyncpa [#allocation6], 1
    %1064 = vsyncpa [#allocation4], 1
    %s1065 = scalar_lea.sflag [#allocation4], 1
    %1066 = vsyncpa %s1065, 1

// kernel: tpu_custom_call.1
$region0: #{tpu_custom_call.1}
  #allocation0 [shape = 'u32[]', space=smem, size = 0x4, offset = 0x4, fixed_abs, tag = 'smem constant byte address 0x4 - core index']
  #allocation1 [shape = 'u32[144,128]{1,0:T(1,128)}', space=vmem, size = 0x12000, scoped, tag = 'internal scratch']
  %s0 = inlined_call_operand.hbm [shape: bf16[2,160,128], index: 0, kind: input, shape index: {}]
  %s1 = inlined_call_operand.hbm [shape: bf16[512,128], index: 1, kind: input, shape index: {}]
  %s2 = inlined_call_operand.vmem [shape: f32[1,128], index: 2, kind: input, shape index: {}]
  %s3 = inlined_call_operand.hbm [shape: f32[2,128,128], index: 3, kind: output, shape index: {}]
  %s4 = sld [smem:[#allocation0]]
  $region53: #{tpu_custom_call.1} parent=0
    _
  %s6 = ssub.s32 1, %s4
  %s7 = scalar_select 0, %s6, %s4
  $region1: #{tpu_custom_call.1} parent=0
    #allocation2 [shape = 'u8[81920]{0}', space=vmem, size = 0x14000, scoped, tag = 'input window, operand 0']
    #allocation3 [shape = 's32[2]{0}', space=sflag, size = 0x8, scoped, tag = 'scoped memory for tpu_custom_call.1']
    #allocation4 [shape = 's32[2]{0}', space=sflag, size = 0x8, scoped, tag = 'scoped memory for tpu_custom_call.1']
    #allocation5 [shape = 'u8[131072]{0}', space=vmem, size = 0x20000, scoped, tag = 'input window, operand 1, single buffered']
    #allocation6 [shape = 's32[1]{0}', space=sflag, size = 0x4, scoped, tag = 'scoped memory for tpu_custom_call.1']
    #allocation7 [shape = 'u8[131072]{0}', space=vmem, size = 0x20000, scoped, tag = 'output window, operand 0']
    %8 = vsyncpa [#allocation3], 0
    %s9 = scalar_lea.sflag [#allocation3], 1
    %10 = vsyncpa %s9, 0
    %11 = vsyncpa [#allocation6], 0
    %12 = vsyncpa [#allocation4], 0
    %s13 = scalar_lea.sflag [#allocation4], 1
    %14 = vsyncpa %s13, 0
    loop: start=0, step=1, limit=4
    $region2: #{tpu_custom_call.1} parent=1 // loop_pre_header
      _
    $region3: #{tpu_custom_call.1} parent=1 // loop_header
      %s16 = sphi 0, %s20
      %p17 = scmp.ge.s32.totalorder %s16, 4
      %s23 = sphi 0, %s35
      %s24 = sphi 0, %s31
      %s25 = sphi 0, %s23
      %s26 = sphi 0, %s24
      %s27 = sphi 0, %s25
      %s28 = sphi 0, %s26
      %s38 = sphi 0, %s40
      %s41 = sphi 0, %s38
      %s42 = sphi 0, %s41
      %s58 = sphi 0, %s42
      %s62 = sphi 0, %s62
      %s64 = sphi 0, %s62
      %s65 = sphi 0, %s64
      %s79 = sphi 0, %s65
      %s83 = sphi 0, %s83
      %s85 = sphi 0, %s83
      %s86 = sphi 0, %s85
      %s100 = sphi 0, %s86
      %s108 = sphi 0, %s110
      %s111 = sphi 0, %s108
      %s112 = sphi 0, %s111
      %s128 = sphi 0, %s112
    $region4: #{tpu_custom_call.1} parent=1 // loop_header_branch
      %19 = sbr.rel (%p17) target = $region8
    $region5: #{tpu_custom_call.1} parent=1 // loop_body
      %s21 = ssub.s32 %s16, 1
      %s22 = ssub.s32 %s16, 2
      %s29 = sadd.s32 1, %s24
      %p30 = scmp.ge.s32.totalorder %s29, 1
      %s31 = scalar_select %p30, 0, %s29
      %s32 = sadd.s32 1, %s23
      %s33 = scalar_select %p30, %s32, %s23
      %p34 = scmp.ge.s32.totalorder %s33, 2
      %s35 = scalar_select %p34, 0, %s33
      %s36 = ssub.s32 %s23, %s35
      %p37 = scmp.eq.s32.totalorder %s36, 0
      %s39 = sadd.s32 %s38, 1
      %s40 = scalar_select %p37, %s38, %s39
      %p43 = pneg %p37
      %p44 = scmp.eq.s32.totalorder %s16, 1
      %p45 = por %p43, %p44
      %p46 = scmp.ne.s32.totalorder %s38, %s41
      %p47 = scmp.eq.s32.totalorder %s16, 0
      %p48 = por %p46, %p47
      %p49 = scmp.ne.s32.totalorder %s38, %s41
      %p50 = scmp.eq.s32.totalorder %s21, 1
      %p51 = por %p49, %p50
      %p52 = scmp.ne.s32.totalorder %s41, %s42
      %p53 = scmp.eq.s32.totalorder %s21, 0
      %p54 = por %p52, %p53
      %p55 = scmp.ne.s32.totalorder %s41, %s42
      %p56 = scmp.eq.s32.totalorder %s22, 1
      %p57 = por %p55, %p56
      %p59 = scmp.ne.s32.totalorder %s42, %s58
      %p60 = scmp.eq.s32.totalorder %s22, 0
      %p61 = por %p59, %p60
      %s63 = sadd.s32 %s62, 1
      %p66 = scmp.eq.s32.totalorder %s16, 1
      %p67 = scmp.ne.s32.totalorder %s62, %s64
      %p68 = scmp.eq.s32.totalorder %s16, 0
      %p69 = por %p67, %p68
      %p70 = scmp.ne.s32.totalorder %s62, %s64
      %p71 = scmp.eq.s32.totalorder %s21, 1
      %p72 = por %p70, %p71
      %p73 = scmp.ne.s32.totalorder %s64, %s65
      %p74 = scmp.eq.s32.totalorder %s21, 0
      %p75 = por %p73, %p74
      %p76 = scmp.ne.s32.totalorder %s64, %s65
      %p77 = scmp.eq.s32.totalorder %s22, 1
      %p78 = por %p76, %p77
      %p80 = scmp.ne.s32.totalorder %s65, %s79
      %p81 = scmp.eq.s32.totalorder %s22, 0
      %p82 = por %p80, %p81
      %s84 = sadd.s32 %s83, 1
      %p87 = scmp.eq.s32.totalorder %s16, 1
      %p88 = scmp.ne.s32.totalorder %s83, %s85
      %p89 = scmp.eq.s32.totalorder %s16, 0
      %p90 = por %p88, %p89
      %p91 = scmp.ne.s32.totalorder %s83, %s85
      %p92 = scmp.eq.s32.totalorder %s21, 1
      %p93 = por %p91, %p92
      %p94 = scmp.ne.s32.totalorder %s85, %s86
      %p95 = scmp.eq.s32.totalorder %s21, 0
      %p96 = por %p94, %p95
      %p97 = scmp.ne.s32.totalorder %s85, %s86
      %p98 = scmp.eq.s32.totalorder %s22, 1
      %p99 = por %p97, %p98
      %p101 = scmp.ne.s32.totalorder %s86, %s100
      %p102 = scmp.eq.s32.totalorder %s22, 0
      %p103 = por %p101, %p102
      %s104 = ssub.s32 %s23, %s35
      %s105 = ssub.s32 %s24, %s31
      %s106 = sor.u32 %s104, %s105
      %p107 = scmp.eq.s32.totalorder %s106, 0
      %s109 = sadd.s32 %s108, 1
      %s110 = scalar_select %p107, %s108, %s109
      %p113 = pneg %p107
      %p114 = scmp.eq.s32.totalorder %s16, 1
      %p115 = por %p113, %p114
      %p116 = scmp.ne.s32.totalorder %s108, %s111
      %p117 = scmp.eq.s32.totalorder %s16, 0
      %p118 = por %p116, %p117
      %p119 = scmp.ne.s32.totalorder %s108, %s111
      %p120 = scmp.eq.s32.totalorder %s21, 1
      %p121 = por %p119, %p120
      %p122 = scmp.ne.s32.totalorder %s111, %s112
      %p123 = scmp.eq.s32.totalorder %s21, 0
      %p124 = por %p122, %p123
      %p125 = scmp.ne.s32.totalorder %s111, %s112
      %p126 = scmp.eq.s32.totalorder %s22, 1
      %p127 = por %p125, %p126
      %p129 = scmp.ne.s32.totalorder %s112, %s128
      %p130 = scmp.eq.s32.totalorder %s22, 0
      %p131 = por %p129, %p130
      %p132 = scmp.le.s32.totalorder 1, %s16
      %p133 = scmp.lt.s32.totalorder %s16, 3
      %p134 = pnand %p132, %p133
      %p135 = pneg %p134
      // Predicated region
      $region9: #{tpu_custom_call.1} parent=5 // pred_check
        _
      $region10: #{tpu_custom_call.1} parent=5 // pred_check_branch
        %137 = sbr.rel (%p134) target = $region12
      $region11: #{tpu_custom_call.1} parent=5 // pred_region
        %s138 = ssub.s32 %s16, 1
        // Predicated region
        $region13: #{tpu_custom_call.1} parent=11 // pred_check
          %p139 = pneg %p75
        $region14: #{tpu_custom_call.1} parent=11 // pred_check_branch
          %141 = sbr.rel (%p139) target = $region16
        $region15: #{tpu_custom_call.1} parent=11 // pred_region
          %s143 = ssub.s32 4096, 4096
          %144 = vsyncadd [#allocation6], %s143
          %s145 = sshll.u32 [#allocation5], 4
          %s146 = int_to_ptr.vmem [resolvable:$true] %s145
          %151 = dma.hbm_to_vmem [thread:$0]  %s1, 4096, %s146, [#allocation6], 64, 64, 4
        $region16: #{tpu_custom_call.1} parent=11 // pred_fallthru
          _
        // Predicated region
        $region17: #{tpu_custom_call.1} parent=11 // pred_check
          %p152 = pneg %p96
        $region18: #{tpu_custom_call.1} parent=11 // pred_check_branch
          %154 = sbr.rel (%p152) target = $region20
        $region19: #{tpu_custom_call.1} parent=11 // pred_region
          _
        $region20: #{tpu_custom_call.1} parent=11 // pred_fallthru
          _
      $region12: #{tpu_custom_call.1} parent=5 // pred_fallthru
        _
      %p155 = scmp.lt.s32.totalorder %s16, 2
      // Predicated region
      $region21: #{tpu_custom_call.1} parent=5 // pred_check
        %p156 = pneg %p155
      $region22: #{tpu_custom_call.1} parent=5 // pred_check_branch
        %158 = sbr.rel (%p156) target = $region24
      $region23: #{tpu_custom_call.1} parent=5 // pred_region
        // Predicated region
        $region25: #{tpu_custom_call.1} parent=23 // pred_check
          %p159 = pneg %p48
        $region26: #{tpu_custom_call.1} parent=23 // pred_check_branch
          %161 = sbr.rel (%p159) target = $region28
        $region27: #{tpu_custom_call.1} parent=23 // pred_region
          %s162 = sand.u32 %s38, 1
          %s163 = scalar_lea.sflag [#allocation3], %s162
          %s164 = sand.u32 %s38, 1
          %s165 = smul.addr %s164, 80
          %s166 = scalar_lea.vmem [#allocation2], %s165
          %s168 = ssub.s32 1280, 1280
          %169 = vsyncadd %s163, %s168
          %s170 = smul.addr %s23, 20
          %s171 = smul.addr %s170, 64
          %s172 = scalar_lea.hbm %s0, %s171
          %s173 = sshll.u32 %s166, 4
          %s174 = int_to_ptr.vmem [resolvable:$true] %s173
          %179 = dma.hbm_to_vmem [thread:$0]  %s172, 1280, %s174, %s163, 64, 64, 4
        $region28: #{tpu_custom_call.1} parent=23 // pred_fallthru
          _
      $region24: #{tpu_custom_call.1} parent=5 // pred_fallthru
        _
      %p180 = scmp.le.s32.totalorder 1, %s16
      %p181 = scmp.lt.s32.totalorder %s16, 3
      %p182 = pnand %p180, %p181
      %p183 = pneg %p182
      // Predicated region
      $region29: #{tpu_custom_call.1} parent=5 // pred_check
        _
      $region30: #{tpu_custom_call.1} parent=5 // pred_check_branch
        %185 = sbr.rel (%p182) target = $region32
      $region31: #{tpu_custom_call.1} parent=5 // pred_region
        %s186 = ssub.s32 %s16, 1
        %s187 = sand.u32 %s41, 1
        %s188 = scalar_lea.sflag [#allocation3], %s187
        %s189 = sand.u32 %s41, 1
        %s190 = smul.addr %s189, 80
        %s191 = scalar_lea.vmem [#allocation2], %s190
        // Predicated region
        $region33: #{tpu_custom_call.1} parent=31 // pred_check
          %p192 = pneg %p54
        $region34: #{tpu_custom_call.1} parent=31 // pred_check_branch
          %194 = sbr.rel (%p192) target = $region36
        $region35: #{tpu_custom_call.1} parent=31 // pred_region
          %195 = dma.done %s188, 1280
        $region36: #{tpu_custom_call.1} parent=31 // pred_fallthru
          _
        // Predicated region
        $region37: #{tpu_custom_call.1} parent=31 // pred_check
          %p196 = pneg %p75
        $region38: #{tpu_custom_call.1} parent=31 // pred_check_branch
          %198 = sbr.rel (%p196) target = $region40
        $region39: #{tpu_custom_call.1} parent=31 // pred_region
          %199 = dma.done [#allocation6], 4096
        $region40: #{tpu_custom_call.1} parent=31 // pred_fallthru
          _
        %s200 = sand.u32 %s41, 1
        %s201 = scalar_lea.sflag [#allocation3], %s200
        %s202 = sand.u32 %s41, 1
        %s203 = smul.addr %s202, 80
        %s204 = scalar_lea.vmem [#allocation2], %s203
        %p205 = pneg %p54
        %p206 = pneg %p51
        %p207 = pneg %p75
        %p208 = pneg %p72
        %p209 = pneg %p96
        %p210 = pneg %p93
        %p211 = pneg %p124
        %p212 = pneg %p121
        %s213 = sand.u32 %s111, 1
        %s214 = scalar_lea.sflag [#allocation4], %s213
        %s215 = sand.u32 %s111, 1
        %s216 = smul.addr %s215, 128
        %s217 = scalar_lea.vmem [#allocation7], %s216
        %s218 = smul.u32 16, %s26
        %s220 = smul.u32 %s26, 128
        %s221 = sadd.s32 %s220, 16
        %s222 = sshra.s32 %s220, 3
        %s223 = sand.u32 %s220, 7
        %s224 = smul.addr %s222, 4
        %s225 = scalar_lea.vmem %s191, %s224 [#allocation2]
        %v226 = vld [vmem:[%s225] sm:$0xf]
        %v227 = vld [vmem:[%s225 + $0x4] sm:$0xf]
        %v228 = vld [vmem:[%s225 + $0x8] sm:$0xf]
        %v229 = vld [vmem:[%s225 + $0xc] sm:$0xf]
        %v230 = vld [vmem:[%s225 + $0x10] sm:$0xf]
        %v231 = vld [vmem:[%s225 + $0x14] sm:$0xf]
        %v232 = vld [vmem:[%s225 + $0x18] sm:$0xf]
        %v233 = vld [vmem:[%s225 + $0x1c] sm:$0xf]
        %v234 = vld [vmem:[%s225 + $0x20] sm:$0xf]
        %v235 = vld [vmem:[%s225 + $0x24] sm:$0xf]
        %v236 = vld [vmem:[%s225 + $0x28] sm:$0xf]
        %v237 = vld [vmem:[%s225 + $0x2c] sm:$0xf]
        %v238 = vld [vmem:[%s225 + $0x30] sm:$0xf]
        %v239 = vld [vmem:[%s225 + $0x34] sm:$0xf]
        %v240 = vld [vmem:[%s225 + $0x38] sm:$0xf]
        %v241 = vld [vmem:[%s225 + $0x3c] sm:$0xf]
        %v242 = vld [vmem:[%s225 + $0x40] sm:$0xf]
        %s243 = sshra.s32 %s221, 3
        %s244 = sand.u32 %s221, 7
        %s245 = smul.addr %s243, 4
        %s246 = scalar_lea.vmem %s191, %s245 [#allocation2]
        %v247 = vld [vmem:[%s246] sm:$0xf]
        %v248 = vld [vmem:[%s246 + $0x4] sm:$0xf]
        %v249 = vld [vmem:[%s246 + $0x8] sm:$0xf]
        %v250 = vld [vmem:[%s246 + $0xc] sm:$0xf]
        %v251 = vld [vmem:[%s246 + $0x10] sm:$0xf]
        %v252 = vld [vmem:[%s246 + $0x14] sm:$0xf]
        %v253 = vld [vmem:[%s246 + $0x18] sm:$0xf]
        %v254 = vld [vmem:[%s246 + $0x1c] sm:$0xf]
        %v255 = vld [vmem:[%s246 + $0x20] sm:$0xf]
        %v256 = vld [vmem:[%s246 + $0x24] sm:$0xf]
        %v257 = vld [vmem:[%s246 + $0x28] sm:$0xf]
        %v258 = vld [vmem:[%s246 + $0x2c] sm:$0xf]
        %v259 = vld [vmem:[%s246 + $0x30] sm:$0xf]
        %v260 = vld [vmem:[%s246 + $0x34] sm:$0xf]
        %v261 = vld [vmem:[%s246 + $0x38] sm:$0xf]
        %v262 = vld [vmem:[%s246 + $0x3c] sm:$0xf]
        %v263 = vld [vmem:[%s246 + $0x40] sm:$0xf]
        %v280 = vunpack.c.l.b16 %v226
        %v281 = vunpack.c.l.b16 %v227
        %v282 = vunpack.c.l.b16 %v228
        %v283 = vunpack.c.l.b16 %v229
        %v284 = vunpack.c.l.b16 %v230
        %v285 = vunpack.c.l.b16 %v231
        %v286 = vunpack.c.l.b16 %v232
        %v287 = vunpack.c.l.b16 %v233
        %v288 = vunpack.c.l.b16 %v234
        %v289 = vunpack.c.l.b16 %v235
        %v290 = vunpack.c.l.b16 %v236
        %v291 = vunpack.c.l.b16 %v237
        %v292 = vunpack.c.l.b16 %v238
        %v293 = vunpack.c.l.b16 %v239
        %v294 = vunpack.c.l.b16 %v240
        %v295 = vunpack.c.l.b16 %v241
        %v296 = vpack.c.b16 %v281, %v280
        %v297 = vpack.c.b16 %v283, %v282
        %v298 = vpack.c.b16 %v285, %v284
        %v299 = vpack.c.b16 %v287, %v286
        %v300 = vpack.c.b16 %v289, %v288
        %v301 = vpack.c.b16 %v291, %v290
        %v302 = vpack.c.b16 %v293, %v292
        %v303 = vpack.c.b16 %v295, %v294
        %v313 = vunpack.c.l.b16 %v242
        %v314 = vpack.c.b16 %v313, %v313
        %vm315 = vsmask.f32 7424
        %v317 = vshrl.u32 %v296, 16
        %v319 = vshll.u32 %v296, 16
        %v321 = vrot.slane %v319, 1
        %v322 = vor.u32 %v317, %v321
        %v324 = vshll.u32 %v297, 16
        %v326 = vrot.slane %v324, 1
        %v327 = vsel %vm315, %v322, %v326
        %v328 = vshrl.u32 %v297, 16
        %v330 = vor.u32 %v328, %v326
        %v332 = vshll.u32 %v298, 16
        %v334 = vrot.slane %v332, 1
        %v335 = vsel %vm315, %v330, %v334
        %v336 = vshrl.u32 %v298, 16
        %v338 = vor.u32 %v336, %v334
        %v340 = vshll.u32 %v299, 16
        %v342 = vrot.slane %v340, 1
        %v343 = vsel %vm315, %v338, %v342
        %v344 = vshrl.u32 %v299, 16
        %v346 = vor.u32 %v344, %v342
        %v348 = vshll.u32 %v300, 16
        %v350 = vrot.slane %v348, 1
        %v351 = vsel %vm315, %v346, %v350
        %v352 = vshrl.u32 %v300, 16
        %v354 = vor.u32 %v352, %v350
        %v356 = vshll.u32 %v301, 16
        %v358 = vrot.slane %v356, 1
        %v359 = vsel %vm315, %v354, %v358
        %v360 = vshrl.u32 %v301, 16
        %v362 = vor.u32 %v360, %v358
        %v364 = vshll.u32 %v302, 16
        %v366 = vrot.slane %v364, 1
        %v367 = vsel %vm315, %v362, %v366
        %v368 = vshrl.u32 %v302, 16
        %v370 = vor.u32 %v368, %v366
        %v372 = vshll.u32 %v303, 16
        %v374 = vrot.slane %v372, 1
        %v375 = vsel %vm315, %v370, %v374
        %v376 = vshrl.u32 %v303, 16
        %v378 = vor.u32 %v376, %v374
        %v380 = vshll.u32 %v314, 16
        %v382 = vrot.slane %v380, 1
        %v383 = vsel %vm315, %v378, %v382
        %v408 = vunpack.c.l.b16 %v247
        %v409 = vunpack.c.l.b16 %v248
        %v410 = vunpack.c.l.b16 %v249
        %v411 = vunpack.c.l.b16 %v250
        %v412 = vunpack.c.l.b16 %v251
        %v413 = vunpack.c.l.b16 %v252
        %v414 = vunpack.c.l.b16 %v253
        %v415 = vunpack.c.l.b16 %v254
        %v416 = vunpack.c.l.b16 %v255
        %v417 = vunpack.c.l.b16 %v256
        %v418 = vunpack.c.l.b16 %v257
        %v419 = vunpack.c.l.b16 %v258
        %v420 = vunpack.c.l.b16 %v259
        %v421 = vunpack.c.l.b16 %v260
        %v422 = vunpack.c.l.b16 %v261
        %v423 = vunpack.c.l.b16 %v262
        %v424 = vpack.c.b16 %v409, %v408
        %v425 = vpack.c.b16 %v411, %v410
        %v426 = vpack.c.b16 %v413, %v412
        %v427 = vpack.c.b16 %v415, %v414
        %v428 = vpack.c.b16 %v417, %v416
        %v429 = vpack.c.b16 %v419, %v418
        %v430 = vpack.c.b16 %v421, %v420
        %v431 = vpack.c.b16 %v423, %v422
        %v441 = vunpack.c.l.b16 %v263
        %v442 = vpack.c.b16 %v441, %v441
        %v444 = vshrl.u32 %v424, 16
        %v446 = vshll.u32 %v424, 16
        %v448 = vrot.slane %v446, 1
        %v449 = vor.u32 %v444, %v448
        %v451 = vshll.u32 %v425, 16
        %v453 = vrot.slane %v451, 1
        %v454 = vsel %vm315, %v449, %v453
        %v455 = vshrl.u32 %v425, 16
        %v457 = vor.u32 %v455, %v453
        %v459 = vshll.u32 %v426, 16
        %v461 = vrot.slane %v459, 1
        %v462 = vsel %vm315, %v457, %v461
        %v463 = vshrl.u32 %v426, 16
        %v465 = vor.u32 %v463, %v461
        %v467 = vshll.u32 %v427, 16
        %v469 = vrot.slane %v467, 1
        %v470 = vsel %vm315, %v465, %v469
        %v471 = vshrl.u32 %v427, 16
        %v473 = vor.u32 %v471, %v469
        %v475 = vshll.u32 %v428, 16
        %v477 = vrot.slane %v475, 1
        %v478 = vsel %vm315, %v473, %v477
        %v479 = vshrl.u32 %v428, 16
        %v481 = vor.u32 %v479, %v477
        %v483 = vshll.u32 %v429, 16
        %v485 = vrot.slane %v483, 1
        %v486 = vsel %vm315, %v481, %v485
        %v487 = vshrl.u32 %v429, 16
        %v489 = vor.u32 %v487, %v485
        %v491 = vshll.u32 %v430, 16
        %v493 = vrot.slane %v491, 1
        %v494 = vsel %vm315, %v489, %v493
        %v495 = vshrl.u32 %v430, 16
        %v497 = vor.u32 %v495, %v493
        %v499 = vshll.u32 %v431, 16
        %v501 = vrot.slane %v499, 1
        %v502 = vsel %vm315, %v497, %v501
        %v503 = vshrl.u32 %v431, 16
        %v505 = vor.u32 %v503, %v501
        %v507 = vshll.u32 %v442, 16
        %v509 = vrot.slane %v507, 1
        %v510 = vsel %vm315, %v505, %v509
        %v519 = vld [vmem:[#allocation5] sm:$0xf]
        %v520 = vld [vmem:[#allocation5 + $0x4] sm:$0xf]
        %v521 = vld [vmem:[#allocation5 + $0x8] sm:$0xf]
        %v522 = vld [vmem:[#allocation5 + $0xc] sm:$0xf]
        %v523 = vld [vmem:[#allocation5 + $0x10] sm:$0xf]
        %v524 = vld [vmem:[#allocation5 + $0x14] sm:$0xf]
        %v525 = vld [vmem:[#allocation5 + $0x18] sm:$0xf]
        %v526 = vld [vmem:[#allocation5 + $0x1c] sm:$0xf]
        %v527 = vld [vmem:[#allocation5 + $0x20] sm:$0xf]
        %v528 = vld [vmem:[#allocation5 + $0x24] sm:$0xf]
        %v529 = vld [vmem:[#allocation5 + $0x28] sm:$0xf]
        %v530 = vld [vmem:[#allocation5 + $0x2c] sm:$0xf]
        %v531 = vld [vmem:[#allocation5 + $0x30] sm:$0xf]
        %v532 = vld [vmem:[#allocation5 + $0x34] sm:$0xf]
        %v533 = vld [vmem:[#allocation5 + $0x38] sm:$0xf]
        %v534 = vld [vmem:[#allocation5 + $0x3c] sm:$0xf]
        %v535 = vld [vmem:[#allocation5 + $0x40] sm:$0xf]
        %v536 = vld [vmem:[#allocation5 + $0x44] sm:$0xf]
        %v537 = vld [vmem:[#allocation5 + $0x48] sm:$0xf]
        %v538 = vld [vmem:[#allocation5 + $0x4c] sm:$0xf]
        %v539 = vld [vmem:[#allocation5 + $0x50] sm:$0xf]
        %v540 = vld [vmem:[#allocation5 + $0x54] sm:$0xf]
        %v541 = vld [vmem:[#allocation5 + $0x58] sm:$0xf]
        %v542 = vld [vmem:[#allocation5 + $0x5c] sm:$0xf]
        %v543 = vld [vmem:[#allocation5 + $0x60] sm:$0xf]
        %v544 = vld [vmem:[#allocation5 + $0x64] sm:$0xf]
        %v545 = vld [vmem:[#allocation5 + $0x68] sm:$0xf]
        %v546 = vld [vmem:[#allocation5 + $0x6c] sm:$0xf]
        %v547 = vld [vmem:[#allocation5 + $0x70] sm:$0xf]
        %v548 = vld [vmem:[#allocation5 + $0x74] sm:$0xf]
        %v549 = vld [vmem:[#allocation5 + $0x78] sm:$0xf]
        %v550 = vld [vmem:[#allocation5 + $0x7c] sm:$0xf]
        %v551 = vld [vmem:[#allocation5 + $0x80] sm:$0xf]
        %v552 = vld [vmem:[#allocation5 + $0x84] sm:$0xf]
        %v553 = vld [vmem:[#allocation5 + $0x88] sm:$0xf]
        %v554 = vld [vmem:[#allocation5 + $0x8c] sm:$0xf]
        %v555 = vld [vmem:[#allocation5 + $0x90] sm:$0xf]
        %v556 = vld [vmem:[#allocation5 + $0x94] sm:$0xf]
        %v557 = vld [vmem:[#allocation5 + $0x98] sm:$0xf]
        %v558 = vld [vmem:[#allocation5 + $0x9c] sm:$0xf]
        %v559 = vld [vmem:[#allocation5 + $0xa0] sm:$0xf]
        %v560 = vld [vmem:[#allocation5 + $0xa4] sm:$0xf]
        %v561 = vld [vmem:[#allocation5 + $0xa8] sm:$0xf]
        %v562 = vld [vmem:[#allocation5 + $0xac] sm:$0xf]
        %v563 = vld [vmem:[#allocation5 + $0xb0] sm:$0xf]
        %v564 = vld [vmem:[#allocation5 + $0xb4] sm:$0xf]
        %v565 = vld [vmem:[#allocation5 + $0xb8] sm:$0xf]
        %v566 = vld [vmem:[#allocation5 + $0xbc] sm:$0xf]
        %v567 = vld [vmem:[#allocation5 + $0xc0] sm:$0xf]
        %v568 = vld [vmem:[#allocation5 + $0xc4] sm:$0xf]
        %v569 = vld [vmem:[#allocation5 + $0xc8] sm:$0xf]
        %v570 = vld [vmem:[#allocation5 + $0xcc] sm:$0xf]
        %v571 = vld [vmem:[#allocation5 + $0xd0] sm:$0xf]
        %v572 = vld [vmem:[#allocation5 + $0xd4] sm:$0xf]
        %v573 = vld [vmem:[#allocation5 + $0xd8] sm:$0xf]
        %v574 = vld [vmem:[#allocation5 + $0xdc] sm:$0xf]
        %v575 = vld [vmem:[#allocation5 + $0xe0] sm:$0xf]
        %v576 = vld [vmem:[#allocation5 + $0xe4] sm:$0xf]
        %v577 = vld [vmem:[#allocation5 + $0xe8] sm:$0xf]
        %v578 = vld [vmem:[#allocation5 + $0xec] sm:$0xf]
        %v579 = vld [vmem:[#allocation5 + $0xf0] sm:$0xf]
        %v580 = vld [vmem:[#allocation5 + $0xf4] sm:$0xf]
        %v581 = vld [vmem:[#allocation5 + $0xf8] sm:$0xf]
        %v582 = vld [vmem:[#allocation5 + $0xfc] sm:$0xf]
        %v583 = vld [vmem:[%s2] sm:$0x1]
        %v585 = vlaneseq
        %v586 = vshrl.u32 %v585, 7
        %v587 = vsub.s32 0, %v586
        %v588 = vrot.slane %v583, %v587
        %v654 = vunpack.c.l.b16 %v519
        %v655 = vunpack.c.l.b16 %v520
        %v656 = vunpack.c.l.b16 %v521
        %v657 = vunpack.c.l.b16 %v522
        %v658 = vunpack.c.l.b16 %v523
        %v659 = vunpack.c.l.b16 %v524
        %v660 = vunpack.c.l.b16 %v525
        %v661 = vunpack.c.l.b16 %v526
        %v662 = vunpack.c.l.b16 %v527
        %v663 = vunpack.c.l.b16 %v528
        %v664 = vunpack.c.l.b16 %v529
        %v665 = vunpack.c.l.b16 %v530
        %v666 = vunpack.c.l.b16 %v531
        %v667 = vunpack.c.l.b16 %v532
        %v668 = vunpack.c.l.b16 %v533
        %v669 = vunpack.c.l.b16 %v534
        %v670 = vunpack.c.l.b16 %v535
        %v671 = vunpack.c.l.b16 %v536
        %v672 = vunpack.c.l.b16 %v537
        %v673 = vunpack.c.l.b16 %v538
        %v674 = vunpack.c.l.b16 %v539
        %v675 = vunpack.c.l.b16 %v540
        %v676 = vunpack.c.l.b16 %v541
        %v677 = vunpack.c.l.b16 %v542
        %v678 = vunpack.c.l.b16 %v543
        %v679 = vunpack.c.l.b16 %v544
        %v680 = vunpack.c.l.b16 %v545
        %v681 = vunpack.c.l.b16 %v546
        %v682 = vunpack.c.l.b16 %v547
        %v683 = vunpack.c.l.b16 %v548
        %v684 = vunpack.c.l.b16 %v549
        %v685 = vunpack.c.l.b16 %v550
        %v686 = vunpack.c.l.b16 %v551
        %v687 = vunpack.c.l.b16 %v552
        %v688 = vunpack.c.l.b16 %v553
        %v689 = vunpack.c.l.b16 %v554
        %v690 = vunpack.c.l.b16 %v555
        %v691 = vunpack.c.l.b16 %v556
        %v692 = vunpack.c.l.b16 %v557
        %v693 = vunpack.c.l.b16 %v558
        %v694 = vunpack.c.l.b16 %v559
        %v695 = vunpack.c.l.b16 %v560
        %v696 = vunpack.c.l.b16 %v561
        %v697 = vunpack.c.l.b16 %v562
        %v698 = vunpack.c.l.b16 %v563
        %v699 = vunpack.c.l.b16 %v564
        %v700 = vunpack.c.l.b16 %v565
        %v701 = vunpack.c.l.b16 %v566
        %v702 = vunpack.c.l.b16 %v567
        %v703 = vunpack.c.l.b16 %v568
        %v704 = vunpack.c.l.b16 %v569
        %v705 = vunpack.c.l.b16 %v570
        %v706 = vunpack.c.l.b16 %v571
        %v707 = vunpack.c.l.b16 %v572
        %v708 = vunpack.c.l.b16 %v573
        %v709 = vunpack.c.l.b16 %v574
        %v710 = vunpack.c.l.b16 %v575
        %v711 = vunpack.c.l.b16 %v576
        %v712 = vunpack.c.l.b16 %v577
        %v713 = vunpack.c.l.b16 %v578
        %v714 = vunpack.c.l.b16 %v579
        %v715 = vunpack.c.l.b16 %v580
        %v716 = vunpack.c.l.b16 %v581
        %v717 = vunpack.c.l.b16 %v582
        %v718 = vpack.c.b16 %v655, %v654
        %v719 = vpack.c.b16 %v657, %v656
        %v720 = vpack.c.b16 %v659, %v658
        %v721 = vpack.c.b16 %v661, %v660
        %v722 = vpack.c.b16 %v663, %v662
        %v723 = vpack.c.b16 %v665, %v664
        %v724 = vpack.c.b16 %v667, %v666
        %v725 = vpack.c.b16 %v669, %v668
        %v726 = vpack.c.b16 %v671, %v670
        %v727 = vpack.c.b16 %v673, %v672
        %v728 = vpack.c.b16 %v675, %v674
        %v729 = vpack.c.b16 %v677, %v676
        %v730 = vpack.c.b16 %v679, %v678
        %v731 = vpack.c.b16 %v681, %v680
        %v732 = vpack.c.b16 %v683, %v682
        %v733 = vpack.c.b16 %v685, %v684
        %v734 = vpack.c.b16 %v687, %v686
        %v735 = vpack.c.b16 %v689, %v688
        %v736 = vpack.c.b16 %v691, %v690
        %v737 = vpack.c.b16 %v693, %v692
        %v738 = vpack.c.b16 %v695, %v694
        %v739 = vpack.c.b16 %v697, %v696
        %v740 = vpack.c.b16 %v699, %v698
        %v741 = vpack.c.b16 %v701, %v700
        %v742 = vpack.c.b16 %v703, %v702
        %v743 = vpack.c.b16 %v705, %v704
        %v744 = vpack.c.b16 %v707, %v706
        %v745 = vpack.c.b16 %v709, %v708
        %v746 = vpack.c.b16 %v711, %v710
        %v747 = vpack.c.b16 %v713, %v712
        %v748 = vpack.c.b16 %v715, %v714
        %v749 = vpack.c.b16 %v717, %v716
        %782 = vmatprep.subr.bf16.mxu0 0
        %783 = vmatpush1.bf16.msra.mxu0 %v725
        %784 = vmatprep.subr.bf16.mxu0 0
        %785 = vmatpush1.bf16.msra.mxu0 %v724
        %786 = vmatprep.subr.bf16.mxu0 0
        %787 = vmatpush1.bf16.msra.mxu0 %v723
        %788 = vmatprep.subr.bf16.mxu0 0
        %789 = vmatpush1.bf16.msra.mxu0 %v722
        %790 = vmatprep.subr.bf16.mxu0 0
        %791 = vmatpush1.bf16.msra.mxu0 %v721
        %792 = vmatprep.subr.bf16.mxu0 0
        %793 = vmatpush1.bf16.msra.mxu0 %v720
        %794 = vmatprep.subr.bf16.mxu0 0
        %795 = vmatpush1.bf16.msra.mxu0 %v719
        %796 = vmatprep.subr.bf16.mxu0 0
        %797 = vmatpush1.bf16.msra.mxu0 %v718
        %798 = vmatprep.subr.bf16.mxu0 0
        %799 = vmatpush2.bf16.msra.mxu0 %v733
        %800 = vmatprep.subr.bf16.mxu0 0
        %801 = vmatpush2.bf16.msra.mxu0 %v732
        %802 = vmatprep.subr.bf16.mxu0 0
        %803 = vmatpush2.bf16.msra.mxu0 %v731
        %804 = vmatprep.subr.bf16.mxu0 0
        %805 = vmatpush2.bf16.msra.mxu0 %v730
        %806 = vmatprep.subr.bf16.mxu0 0
        %807 = vmatpush2.bf16.msra.mxu0 %v729
        %808 = vmatprep.subr.bf16.mxu0 0
        %809 = vmatpush2.bf16.msra.mxu0 %v728
        %810 = vmatprep.subr.bf16.mxu0 0
        %811 = vmatpush2.bf16.msra.mxu0 %v727
        %812 = vmatprep.subr.bf16.mxu0 0
        %813 = vmatpush2.bf16.msra.mxu0 %v726
        %814 = vmatprep.mubr.bf16.mxu0 %v327
        %815 = vmatmul.mubr.bf16.gmra.mxu0 %v296
        %v816 = vpop.f32.mrf.mxu0
        %v817 = vadd.f32 %v588, %v816
        %v818 = vpop.f32.mrf.mxu0
        %v819 = vpop.f32.mrf.mxu0
        %v820 = vadd.f32 %v588, %v819
        %v821 = vpop.f32.mrf.mxu0
        %822 = vmatprep.mubr.bf16.mxu0 %v335
        %823 = vmatmul.mubr.bf16.gmra.mxu0 %v297
        %v824 = vpop.f32.mrf.mxu0
        %v825 = vadd.f32 %v588, %v824
        %v826 = vpop.f32.mrf.mxu0
        %v827 = vpop.f32.mrf.mxu0
        %v828 = vadd.f32 %v588, %v827
        %v829 = vpop.f32.mrf.mxu0
        %830 = vmatprep.mubr.bf16.mxu0 %v343
        %831 = vmatmul.mubr.bf16.gmra.mxu0 %v298
        %v832 = vpop.f32.mrf.mxu0
        %v833 = vadd.f32 %v588, %v832
        %v834 = vpop.f32.mrf.mxu0
        %v835 = vpop.f32.mrf.mxu0
        %v836 = vadd.f32 %v588, %v835
        %v837 = vpop.f32.mrf.mxu0
        %838 = vmatprep.mubr.bf16.mxu0 %v351
        %839 = vmatmul.mubr.bf16.gmra.mxu0 %v299
        %v840 = vpop.f32.mrf.mxu0
        %v841 = vadd.f32 %v588, %v840
        %v842 = vpop.f32.mrf.mxu0
        %v843 = vpop.f32.mrf.mxu0
        %v844 = vadd.f32 %v588, %v843
        %v845 = vpop.f32.mrf.mxu0
        %846 = vmatprep.mubr.bf16.mxu0 %v359
        %847 = vmatmul.mubr.bf16.gmra.mxu0 %v300
        %v848 = vpop.f32.mrf.mxu0
        %v849 = vadd.f32 %v588, %v848
        %v850 = vpop.f32.mrf.mxu0
        %v851 = vpop.f32.mrf.mxu0
        %v852 = vadd.f32 %v588, %v851
        %v853 = vpop.f32.mrf.mxu0
        %854 = vmatprep.mubr.bf16.mxu0 %v367
        %855 = vmatmul.mubr.bf16.gmra.mxu0 %v301
        %v856 = vpop.f32.mrf.mxu0
        %v857 = vadd.f32 %v588, %v856
        %v858 = vpop.f32.mrf.mxu0
        %v859 = vpop.f32.mrf.mxu0
        %v860 = vadd.f32 %v588, %v859
        %v861 = vpop.f32.mrf.mxu0
        %862 = vmatprep.mubr.bf16.mxu0 %v375
        %863 = vmatmul.mubr.bf16.gmra.mxu0 %v302
        %v864 = vpop.f32.mrf.mxu0
        %v865 = vadd.f32 %v588, %v864
        %v866 = vpop.f32.mrf.mxu0
        %v867 = vpop.f32.mrf.mxu0
        %v868 = vadd.f32 %v588, %v867
        %v869 = vpop.f32.mrf.mxu0
        %870 = vmatprep.mubr.bf16.mxu0 %v383
        %871 = vmatmul.mubr.bf16.gmra.mxu0 %v303
        %v872 = vpop.f32.mrf.mxu0
        %v873 = vadd.f32 %v588, %v872
        %v874 = vpop.f32.mrf.mxu0
        %v875 = vpop.f32.mrf.mxu0
        %v876 = vadd.f32 %v588, %v875
        %v877 = vpop.f32.mrf.mxu0
        %878 = vdwg.mxu0
        %879 = vmatprep.subr.bf16.mxu0 0
        %880 = vmatpush1.bf16.msra.mxu0 %v741
        %881 = vmatprep.subr.bf16.mxu0 0
        %882 = vmatpush1.bf16.msra.mxu0 %v740
        %883 = vmatprep.subr.bf16.mxu0 0
        %884 = vmatpush1.bf16.msra.mxu0 %v739
        %885 = vmatprep.subr.bf16.mxu0 0
        %886 = vmatpush1.bf16.msra.mxu0 %v738
        %887 = vmatprep.subr.bf16.mxu0 0
        %888 = vmatpush1.bf16.msra.mxu0 %v737
        %889 = vmatprep.subr.bf16.mxu0 0
        %890 = vmatpush1.bf16.msra.mxu0 %v736
        %891 = vmatprep.subr.bf16.mxu0 0
        %892 = vmatpush1.bf16.msra.mxu0 %v735
        %893 = vmatprep.subr.bf16.mxu0 0
        %894 = vmatpush1.bf16.msra.mxu0 %v734
        %895 = vmatprep.subr.bf16.mxu0 0
        %896 = vmatpush2.bf16.msra.mxu0 %v749
        %897 = vmatprep.subr.bf16.mxu0 0
        %898 = vmatpush2.bf16.msra.mxu0 %v748
        %899 = vmatprep.subr.bf16.mxu0 0
        %900 = vmatpush2.bf16.msra.mxu0 %v747
        %901 = vmatprep.subr.bf16.mxu0 0
        %902 = vmatpush2.bf16.msra.mxu0 %v746
        %903 = vmatprep.subr.bf16.mxu0 0
        %904 = vmatpush2.bf16.msra.mxu0 %v745
        %905 = vmatprep.subr.bf16.mxu0 0
        %906 = vmatpush2.bf16.msra.mxu0 %v744
        %907 = vmatprep.subr.bf16.mxu0 0
        %908 = vmatpush2.bf16.msra.mxu0 %v743
        %909 = vmatprep.subr.bf16.mxu0 0
        %910 = vmatpush2.bf16.msra.mxu0 %v742
        %911 = vmatprep.mubr.bf16.mxu0 %v454
        %912 = vmatmul.mubr.bf16.gmra.mxu0 %v424
        %v913 = vpop.f32.mrf.mxu0
        %v914 = vadd.f32 %v817, %v913
        %v915 = vpop.f32.mrf.mxu0
        %v916 = vpop.f32.mrf.mxu0
        %v917 = vadd.f32 %v820, %v916
        %v918 = vpop.f32.mrf.mxu0
        %919 = vmatprep.mubr.bf16.mxu0 %v462
        %920 = vmatmul.mubr.bf16.gmra.mxu0 %v425
        %v921 = vpop.f32.mrf.mxu0
        %v922 = vadd.f32 %v825, %v921
        %v923 = vpop.f32.mrf.mxu0
        %v924 = vpop.f32.mrf.mxu0
        %v925 = vadd.f32 %v828, %v924
        %v926 = vpop.f32.mrf.mxu0
        %927 = vmatprep.mubr.bf16.mxu0 %v470
        %928 = vmatmul.mubr.bf16.gmra.mxu0 %v426
        %v929 = vpop.f32.mrf.mxu0
        %v930 = vadd.f32 %v833, %v929
        %v931 = vpop.f32.mrf.mxu0
        %v932 = vpop.f32.mrf.mxu0
        %v933 = vadd.f32 %v836, %v932
        %v934 = vpop.f32.mrf.mxu0
        %935 = vmatprep.mubr.bf16.mxu0 %v478
        %936 = vmatmul.mubr.bf16.gmra.mxu0 %v427
        %v937 = vpop.f32.mrf.mxu0
        %v938 = vadd.f32 %v841, %v937
        %v939 = vpop.f32.mrf.mxu0
        %v940 = vpop.f32.mrf.mxu0
        %v941 = vadd.f32 %v844, %v940
        %v942 = vpop.f32.mrf.mxu0
        %943 = vmatprep.mubr.bf16.mxu0 %v486
        %944 = vmatmul.mubr.bf16.gmra.mxu0 %v428
        %v945 = vpop.f32.mrf.mxu0
        %v946 = vadd.f32 %v849, %v945
        %v947 = vpop.f32.mrf.mxu0
        %v948 = vpop.f32.mrf.mxu0
        %v949 = vadd.f32 %v852, %v948
        %v950 = vpop.f32.mrf.mxu0
        %951 = vmatprep.mubr.bf16.mxu0 %v494
        %952 = vmatmul.mubr.bf16.gmra.mxu0 %v429
        %v953 = vpop.f32.mrf.mxu0
        %v954 = vadd.f32 %v857, %v953
        %v955 = vpop.f32.mrf.mxu0
        %v956 = vpop.f32.mrf.mxu0
        %v957 = vadd.f32 %v860, %v956
        %v958 = vpop.f32.mrf.mxu0
        %959 = vmatprep.mubr.bf16.mxu0 %v502
        %960 = vmatmul.mubr.bf16.gmra.mxu0 %v430
        %v961 = vpop.f32.mrf.mxu0
        %v962 = vadd.f32 %v865, %v961
        %v963 = vpop.f32.mrf.mxu0
        %v964 = vpop.f32.mrf.mxu0
        %v965 = vadd.f32 %v868, %v964
        %v966 = vpop.f32.mrf.mxu0
        %967 = vmatprep.mubr.bf16.mxu0 %v510
        %968 = vmatmul.mubr.bf16.gmra.mxu0 %v431
        %v969 = vpop.f32.mrf.mxu0
        %v970 = vadd.f32 %v873, %v969
        %v971 = vpop.f32.mrf.mxu0
        %v972 = vpop.f32.mrf.mxu0
        %v973 = vadd.f32 %v876, %v972
        %v974 = vpop.f32.mrf.mxu0
        %975 = vdwg.mxu0
        %vm976 = vcmp.ge.f32.partialorder %v914, 0.0
        %vm977 = vcmp.ge.f32.partialorder %v917, 0.0
        %vm978 = vcmp.ge.f32.partialorder %v922, 0.0
        %vm979 = vcmp.ge.f32.partialorder %v925, 0.0
        %vm980 = vcmp.ge.f32.partialorder %v930, 0.0
        %vm981 = vcmp.ge.f32.partialorder %v933, 0.0
        %vm982 = vcmp.ge.f32.partialorder %v938, 0.0
        %vm983 = vcmp.ge.f32.partialorder %v941, 0.0
        %vm984 = vcmp.ge.f32.partialorder %v946, 0.0
        %vm985 = vcmp.ge.f32.partialorder %v949, 0.0
        %vm986 = vcmp.ge.f32.partialorder %v954, 0.0
        %vm987 = vcmp.ge.f32.partialorder %v957, 0.0
        %vm988 = vcmp.ge.f32.partialorder %v962, 0.0
        %vm989 = vcmp.ge.f32.partialorder %v965, 0.0
        %vm990 = vcmp.ge.f32.partialorder %v970, 0.0
        %vm991 = vcmp.ge.f32.partialorder %v973, 0.0
        %v992 = vmul.f32 %v914, 0.2
        %v993 = vmul.f32 %v917, 0.2
        %v994 = vmul.f32 %v922, 0.2
        %v995 = vmul.f32 %v925, 0.2
        %v996 = vmul.f32 %v930, 0.2
        %v997 = vmul.f32 %v933, 0.2
        %v998 = vmul.f32 %v938, 0.2
        %v999 = vmul.f32 %v941, 0.2
        %v1000 = vmul.f32 %v946, 0.2
        %v1001 = vmul.f32 %v949, 0.2
        %v1002 = vmul.f32 %v954, 0.2
        %v1003 = vmul.f32 %v957, 0.2
        %v1004 = vmul.f32 %v962, 0.2
        %v1005 = vmul.f32 %v965, 0.2
        %v1006 = vmul.f32 %v970, 0.2
        %v1007 = vmul.f32 %v973, 0.2
        %v1008 = vsel %vm976, %v914, %v992
        %v1009 = vsel %vm977, %v917, %v993
        %v1010 = vsel %vm978, %v922, %v994
        %v1011 = vsel %vm979, %v925, %v995
        %v1012 = vsel %vm980, %v930, %v996
        %v1013 = vsel %vm981, %v933, %v997
        %v1014 = vsel %vm982, %v938, %v998
        %v1015 = vsel %vm983, %v941, %v999
        %v1016 = vsel %vm984, %v946, %v1000
        %v1017 = vsel %vm985, %v949, %v1001
        %v1018 = vsel %vm986, %v954, %v1002
        %v1019 = vsel %vm987, %v957, %v1003
        %v1020 = vsel %vm988, %v962, %v1004
        %v1021 = vsel %vm989, %v965, %v1005
        %v1022 = vsel %vm990, %v970, %v1006
        %v1023 = vsel %vm991, %v973, %v1007
        %1024 = vst [vmem:[%s217] sm:$0xff] %v1008
        %1025 = vst [vmem:[%s217 + $0x8] sm:$0xff] %v1009
        %1026 = vst [vmem:[%s217 + $0x10] sm:$0xff] %v1010
        %1027 = vst [vmem:[%s217 + $0x18] sm:$0xff] %v1011
        %1028 = vst [vmem:[%s217 + $0x20] sm:$0xff] %v1012
        %1029 = vst [vmem:[%s217 + $0x28] sm:$0xff] %v1013
        %1030 = vst [vmem:[%s217 + $0x30] sm:$0xff] %v1014
        %1031 = vst [vmem:[%s217 + $0x38] sm:$0xff] %v1015
        %1032 = vst [vmem:[%s217 + $0x40] sm:$0xff] %v1016
        %1033 = vst [vmem:[%s217 + $0x48] sm:$0xff] %v1017
        %1034 = vst [vmem:[%s217 + $0x50] sm:$0xff] %v1018
        %1035 = vst [vmem:[%s217 + $0x58] sm:$0xff] %v1019
        %1036 = vst [vmem:[%s217 + $0x60] sm:$0xff] %v1020
        %1037 = vst [vmem:[%s217 + $0x68] sm:$0xff] %v1021
        %1038 = vst [vmem:[%s217 + $0x70] sm:$0xff] %v1022
        %1039 = vst [vmem:[%s217 + $0x78] sm:$0xff] %v1023
        %s1040 = sand.u32 %s111, 1
        %s1041 = scalar_lea.sflag [#allocation4], %s1040
        %s1042 = sand.u32 %s111, 1
        %s1043 = smul.addr %s1042, 128
        %s1044 = scalar_lea.vmem [#allocation7], %s1043
        // Predicated region
        $region41: #{tpu_custom_call.1} parent=31 // pred_check
          %p1045 = pneg %p121
        $region42: #{tpu_custom_call.1} parent=31 // pred_check_branch
          %1047 = sbr.rel (%p1045) target = $region44
        $region43: #{tpu_custom_call.1} parent=31 // pred_region
          %s1048 = smul.u32 16, %s26
          %s1050 = ssub.s32 2048, 2048
          %1051 = vsyncadd %s1041, %s1050
          %s1052 = smul.addr %s25, 16
          %s1053 = sadd.s32 %s1048, %s1052
          %s1054 = smul.addr %s1053, 128
          %s1055 = scalar_lea.hbm %s3, %s1054
          %s1056 = sshll.u32 %s1044, 4
          %s1057 = int_to_ptr.vmem [resolvable:$true] %s1056
          %1062 = dma.vmem_to_hbm [thread:$0]  %s1057, 2048, %s1055, %s1041, 128, 128, 8
        $region44: #{tpu_custom_call.1} parent=31 // pred_fallthru
          _
      $region32: #{tpu_custom_call.1} parent=5 // pred_fallthru
        _
      %p1063 = scmp.le.s32.totalorder 2, %s16
      // Predicated region
      $region45: #{tpu_custom_call.1} parent=5 // pred_check
        %p1064 = pneg %p1063
      $region46: #{tpu_custom_call.1} parent=5 // pred_check_branch
        %1066 = sbr.rel (%p1064) target = $region48
      $region47: #{tpu_custom_call.1} parent=5 // pred_region
        %s1067 = ssub.s32 %s16, 2
        // Predicated region
        $region49: #{tpu_custom_call.1} parent=47 // pred_check
          %p1068 = pneg %p127
        $region50: #{tpu_custom_call.1} parent=47 // pred_check_branch
          %1070 = sbr.rel (%p1068) target = $region52
        $region51: #{tpu_custom_call.1} parent=47 // pred_region
          %s1071 = sand.u32 %s112, 1
          %s1072 = scalar_lea.sflag [#allocation4], %s1071
          %s1073 = sand.u32 %s112, 1
          %s1074 = smul.addr %s1073, 128
          %s1075 = scalar_lea.vmem [#allocation7], %s1074
          %1076 = dma.done %s1072, 2048
        $region52: #{tpu_custom_call.1} parent=47 // pred_fallthru
          _
      $region48: #{tpu_custom_call.1} parent=5 // pred_fallthru
        _
    $region6: #{tpu_custom_call.1} parent=1 // loop_footer
      %s20 = sadd.s32 1, %s16
    $region7: #{tpu_custom_call.1} parent=1 // loop_footer_branch
      %15 = sbr.rel target = $region3
    $region8: #{tpu_custom_call.1} parent=1 // loop_exit
      _
    %1077 = vsyncpa [#allocation3], 1
    %s1078 = scalar_lea.sflag [#allocation3], 1
    %1079 = vsyncpa %s1078, 1
    %1080 = vsyncpa [#allocation6], 1
    %1081 = vsyncpa [#allocation4], 1
    %s1082 = scalar_lea.sflag [#allocation4], 1
    %1083 = vsyncpa %s1082, 1

</llo_original>
